<compile_context>
chip_gen: v7x
topology: tpu7x:2x2x1
jax: 0.10.0
libtpu: 0.0.40
codegen_flags: <defaults>
</compile_context>

<pallas_src>
import functools

import jax
import jax.numpy as jnp
from jax.experimental import pallas as pl
from jax.experimental.pallas import tpu as pltpu

# ----------------------------- configuration -------------------------------
HIDDEN = 32
MAX_NODES = 8
MAX_TSTEPS = 4
MAX_ACTIONS = 10
BATCH = 2


# ------------------------------ fused kernel --------------------------------
def _fused_forward_kernel(act_ref, gr_ref, table_ref, wca_ref, wcg_ref, bc_ref,
                          wih1_ref, whh1_ref, b1_ref, wih2_ref, whh2_ref,
                          b2_ref, out_ref, *, hidden, tsteps, max_actions):
    H, T = hidden, tsteps

    # ---- action embedding as one-hot @ table (no XLA gather / extra HBM) ----
    act = act_ref[0]                                             # (T, 1) int32
    onehot = (jax.lax.broadcasted_iota(jnp.int32, (T, max_actions), 1)
              == act).astype(jnp.float32)                        # (T, A)
    a_embed = jnp.dot(onehot, table_ref[...],
                      preferred_element_type=jnp.float32)        # (T, H)

    # ---- graph_repr with the torch NaN -> 1 fix ------------------------------
    ge = gr_ref[0]                                               # (T, H)
    ge = jnp.where(jnp.isnan(ge), 1.0, ge)

    # ---- comb_layer(cat([action_embed, graph_repr])) via split weights ------
    x = (jnp.dot(a_embed, wca_ref[...], preferred_element_type=jnp.float32)
         + jnp.dot(ge, wcg_ref[...], preferred_element_type=jnp.float32)
         + bc_ref[...])                                          # (T, H)

    # ---- 2-layer LSTM (batch_first semantics, zero initial state) -----------
    def lstm_layer(inp, wih, whh, b):
        # One wide matmul for every timestep's input projection (gate order
        # i, f, g, o as in PyTorch; bias is b_ih + b_hh).
        gi = jnp.dot(inp, wih, preferred_element_type=jnp.float32) + b  # (T,4H)
        h = jnp.zeros((1, H), jnp.float32)
        c = jnp.zeros((1, H), jnp.float32)
        outs = []
        for t in range(T):  # static unroll: T is tiny, full scheduler visibility
            g = gi[t:t + 1, :] + jnp.dot(
                h, whh, preferred_element_type=jnp.float32)      # (1, 4H)
            sg = jax.nn.sigmoid(g)   # whole-vreg sigmoid (EUP), slice afterwards
            tg = jnp.tanh(g)
            i_g = sg[:, 0 * H:1 * H]
            f_g = sg[:, 1 * H:2 * H]
            g_g = tg[:, 2 * H:3 * H]
            o_g = sg[:, 3 * H:4 * H]
            c = f_g * c + i_g * g_g
            h = o_g * jnp.tanh(c)
            outs.append(h)
        return outs

    h1 = lstm_layer(x, wih1_ref[...], whh1_ref[...], b1_ref[...])
    h2 = lstm_layer(jnp.concatenate(h1, axis=0),
                    wih2_ref[...], whh2_ref[...], b2_ref[...])

    # ---- single lane-dense (1, T*H) = (1, 128) store -------------------------
    out_ref[0] = jnp.concatenate(h2, axis=-1)


# ------------------------------ parameters ----------------------------------
def _lin_init(key, din, dout, scale=0.05):
    kw, kb = jax.random.split(key)
    w = jax.random.normal(kw, (din, dout), jnp.float32) * scale
    b = jax.random.normal(kb, (dout,), jnp.float32) * scale
    return w, b


def init_params(key):
    H = HIDDEN
    ks = jax.random.split(key, 4)
    params = {}
    params["action_embedding"] = (
        jax.random.normal(ks[0], (MAX_ACTIONS, H), jnp.float32) * 0.05)
    params["comb_layer"] = _lin_init(ks[1], 2 * H, H)   # Linear(2H -> H)

    # 2-layer LSTM. Weights stored transposed (din, 4H); bias = b_ih + b_hh.
    def lstm_layer(k, din):
        k1, k2, k3, k4 = jax.random.split(k, 4)
        wih = jax.random.normal(k1, (din, 4 * H), jnp.float32) * 0.05
        whh = jax.random.normal(k2, (H, 4 * H), jnp.float32) * 0.05
        b_ih = jax.random.normal(k3, (4 * H,), jnp.float32) * 0.05
        b_hh = jax.random.normal(k4, (4 * H,), jnp.float32) * 0.05
        return wih, whh, (b_ih + b_hh).reshape(1, 4 * H)

    params["lstm"] = lstm_layer(ks[2], H) + lstm_layer(ks[3], H)
    return params


# ------------------------------ forward pass ---------------------------------
@jax.jit
def _forward_jit(params, action, node_embeddings):
    B, T, N, H = node_embeddings.shape
    A = params["action_embedding"].shape[0]

    graph_repr = node_embeddings[:, :, 0].astype(jnp.float32)    # (B, T, H)
    wc, bc = params["comb_layer"]
    wih1, whh1, b1, wih2, whh2, b2 = params["lstm"]

    kern = functools.partial(_fused_forward_kernel,
                             hidden=H, tsteps=T, max_actions=A)

    def rep(shape):  # replicated (weight) spec
        return pl.BlockSpec(shape, lambda b: (0,) * len(shape))

    out_packed = pl.pallas_call(
        kern,
        out_shape=jax.ShapeDtypeStruct((B, 1, T * H), jnp.float32),
        grid=(B,),
        in_specs=[
            pl.BlockSpec((1, T, 1), lambda b: (b, 0, 0)),    # action ids
            pl.BlockSpec((1, T, H), lambda b: (b, 0, 0)),    # graph_repr
            rep((A, H)),                                     # embedding table
            rep((H, H)), rep((H, H)), rep((1, H)),           # comb_layer (split)
            rep((H, 4 * H)), rep((H, 4 * H)), rep((1, 4 * H)),   # LSTM layer 1
            rep((H, 4 * H)), rep((H, 4 * H)), rep((1, 4 * H)),   # LSTM layer 2
        ],
        out_specs=pl.BlockSpec((1, 1, T * H), lambda b: (b, 0, 0)),
        compiler_params=pltpu.CompilerParams(
            dimension_semantics=("parallel",),   # v7x: batch split over 2 TCs
            vmem_limit_bytes=32 * 1024 * 1024),
    )(action.astype(jnp.int32).reshape(B, T, 1),
      graph_repr,
      params["action_embedding"],
      wc[:H], wc[H:], bc.reshape(1, H),
      wih1, whh1, b1, wih2, whh2, b2)
    return out_packed.reshape(B, T, H)


def forward(params, inputs):
    """ActionCharNetwork.forward with cond=None, goal_inp=False."""
    program = inputs["program"]
    graph = inputs["graph"]
    _ = inputs["mask_len"]                 # fetched but unused by torch forward
    _ = graph["mask_object"]
    _ = program["indobj1"], program["indobj2"]

    # matches: assert torch.all(inputs['graph']['node_ids'][:, 0, 0] == 1)
    assert bool(jnp.all(graph["node_ids"][:, 0, 0] == 1))

    # TODO(synk): graph_encoder (base_nets.TransformerBase) not provided;
    # node_embeddings is taken directly as an input.
    return _forward_jit(params, program["action"], graph["node_embeddings"])


# ------------------------------ pure-jnp reference ---------------------------
def _reference_forward(params, action, node_embeddings):
    B, T, N, H = node_embeddings.shape
    ne = jnp.where(jnp.isnan(node_embeddings), 1.0, node_embeddings)
    graph_repr = ne[:, :, 0]
    a_embed = params["action_embedding"][action]
    wc, bc = params["comb_layer"]
    x = jnp.concatenate([a_embed, graph_repr], -1) @ wc + bc      # (B, T, H)
    wih1, whh1, b1, wih2, whh2, b2 = params["lstm"]

    def run_layer(inp, wih, whh, b):
        def step(carry, xt):
            h, c = carry
            g = xt @ wih + h @ whh + b[0]
            i = jax.nn.sigmoid(g[:, :H])
            f = jax.nn.sigmoid(g[:, H:2 * H])
            gg = jnp.tanh(g[:, 2 * H:3 * H])
            o = jax.nn.sigmoid(g[:, 3 * H:])
            c = f * c + i * gg
            h = o * jnp.tanh(c)
            return (h, c), h
        init = (jnp.zeros((B, H), jnp.float32), jnp.zeros((B, H), jnp.float32))
        _, hs = jax.lax.scan(step, init, jnp.transpose(inp, (1, 0, 2)))
        return jnp.transpose(hs, (1, 0, 2))

    h1 = run_layer(x, wih1, whh1, b1)
    return run_layer(h1, wih2, whh2, b2)


# ---------------------------------- main -------------------------------------
if __name__ == "__main__":
    key = jax.random.PRNGKey(0)
    kp, kd = jax.random.split(key)
    params = init_params(kp)

    B, T, N, H = BATCH, MAX_TSTEPS, MAX_NODES, HIDDEN
    k1, k2, k3, k4, k5 = jax.random.split(kd, 5)
    node_embeddings = jax.random.normal(k1, (B, T, N, H), jnp.float32)
    # exercise the `node_embeddings[isnan] = 1` path on the used (node-0) slice
    node_embeddings = node_embeddings.at[0, 1, 0, 3].set(jnp.nan)
    action = jax.random.randint(k2, (B, T), 0, MAX_ACTIONS)
    mask_object = (jax.random.uniform(k3, (B, T, N)) > 0.3).astype(jnp.float32)
    mask_len = jnp.ones((B, T), jnp.float32)
    node_ids = jnp.ones((B, T, N), jnp.int32)       # node_ids[:, 0, 0] == 1
    indobj1 = jax.random.randint(k4, (B, T), 0, N)
    indobj2 = jax.random.randint(k5, (B, T), 0, N)

    inputs = {
        "program": {"action": action, "indobj1": indobj1, "indobj2": indobj2},
        "graph": {"node_embeddings": node_embeddings,
                  "mask_object": mask_object,
                  "node_ids": node_ids},
        "mask_len": mask_len,
    }

    graph_output = forward(params, inputs)
    graph_output = jax.block_until_ready(graph_output)

    assert graph_output.shape == (B, T, H)
    assert bool(jnp.all(jnp.isfinite(graph_output)))

    ref = _reference_forward(params, action, node_embeddings)
    assert bool(jnp.allclose(graph_output, ref, rtol=1e-3, atol=1e-3)), (
        "max|diff|=" + str(float(jnp.max(jnp.abs(graph_output - ref)))))
    print("KERNEL_OK")
</pallas_src>

<mosaic_0001>
module attributes {stable_mosaic.version = 11 : i64} {
  func.func @_fused_forward_kernel(%arg0: i32, %arg1: memref<1x4x1xi32, #tpu.memory_space<vmem>>, %arg2: memref<1x4x32xf32, #tpu.memory_space<vmem>>, %arg3: memref<10x32xf32, #tpu.memory_space<vmem>>, %arg4: memref<32x32xf32, #tpu.memory_space<vmem>>, %arg5: memref<32x32xf32, #tpu.memory_space<vmem>>, %arg6: memref<1x32xf32, #tpu.memory_space<vmem>>, %arg7: memref<32x128xf32, #tpu.memory_space<vmem>>, %arg8: memref<32x128xf32, #tpu.memory_space<vmem>>, %arg9: memref<1x128xf32, #tpu.memory_space<vmem>>, %arg10: memref<32x128xf32, #tpu.memory_space<vmem>>, %arg11: memref<32x128xf32, #tpu.memory_space<vmem>>, %arg12: memref<1x128xf32, #tpu.memory_space<vmem>>, %arg13: memref<1x1x128xf32, #tpu.memory_space<vmem>>) attributes {dimension_semantics = [#tpu.dimension_semantics<parallel>], iteration_bounds = array<i64: 2>, scalar_prefetch = 0 : i64, scratch_operands = 0 : i64, tpu.core_type = #tpu.core_type<tc>, window_params = [{transform_indices = @transform_0, window_bounds = array<i64: 1, 4, 1>}, {transform_indices = @transform_1, window_bounds = array<i64: 1, 4, 32>}, {pipeline_mode = #tpu.pipeline_mode<synchronous>, transform_indices = @transform_2, window_bounds = array<i64: 10, 32>}, {pipeline_mode = #tpu.pipeline_mode<synchronous>, transform_indices = @transform_3, window_bounds = array<i64: 32, 32>}, {pipeline_mode = #tpu.pipeline_mode<synchronous>, transform_indices = @transform_4, window_bounds = array<i64: 32, 32>}, {pipeline_mode = #tpu.pipeline_mode<synchronous>, transform_indices = @transform_5, window_bounds = array<i64: 1, 32>}, {pipeline_mode = #tpu.pipeline_mode<synchronous>, transform_indices = @transform_6, window_bounds = array<i64: 32, 128>}, {pipeline_mode = #tpu.pipeline_mode<synchronous>, transform_indices = @transform_7, window_bounds = array<i64: 32, 128>}, {pipeline_mode = #tpu.pipeline_mode<synchronous>, transform_indices = @transform_8, window_bounds = array<i64: 1, 128>}, {pipeline_mode = #tpu.pipeline_mode<synchronous>, transform_indices = @transform_9, window_bounds = array<i64: 32, 128>}, {pipeline_mode = #tpu.pipeline_mode<synchronous>, transform_indices = @transform_10, window_bounds = array<i64: 32, 128>}, {pipeline_mode = #tpu.pipeline_mode<synchronous>, transform_indices = @transform_11, window_bounds = array<i64: 1, 128>}, {transform_indices = @transform_12, window_bounds = array<i64: 1, 1, 128>}]} {
    %c0 = arith.constant 0 : index
    %c0_0 = arith.constant 0 : index
    %c0_1 = arith.constant 0 : index
    %0 = vector.load %arg1[%c0, %c0_0, %c0_1] : memref<1x4x1xi32, #tpu.memory_space<vmem>>, vector<1x4x1xi32>
    %1 = vector.shape_cast %0 : vector<1x4x1xi32> to vector<4x1xi32>
    %2 = tpu.iota {dimensions = array<i32: 1>} : vector<4x10xi32>
    %3 = vector.broadcast %1 : vector<4x1xi32> to vector<4x10xi32>
    %4 = arith.cmpi eq, %2, %3 : vector<4x10xi32>
    %5 = arith.extui %4 : vector<4x10xi1> to vector<4x10xi32>
    %6 = arith.sitofp %5 : vector<4x10xi32> to vector<4x10xf32>
    %c0_2 = arith.constant 0 : index
    %c0_3 = arith.constant 0 : index
    %7 = vector.load %arg3[%c0_2, %c0_3] : memref<10x32xf32, #tpu.memory_space<vmem>>, vector<10x32xf32>
    %cst = arith.constant dense<0.000000e+00> : vector<4x32xf32>
    %8 = tpu.matmul %6, %7, %cst {dimension_numbers = #tpu.dot_dimension_numbers<[1], [0], [0], [1], [0, 0, 1, 1], [], []>} : vector<4x10xf32>, vector<10x32xf32>, vector<4x32xf32> -> vector<4x32xf32>
    %c0_4 = arith.constant 0 : index
    %c0_5 = arith.constant 0 : index
    %c0_6 = arith.constant 0 : index
    %9 = vector.load %arg2[%c0_4, %c0_5, %c0_6] : memref<1x4x32xf32, #tpu.memory_space<vmem>>, vector<1x4x32xf32>
    %10 = vector.shape_cast %9 : vector<1x4x32xf32> to vector<4x32xf32>
    %11 = arith.cmpf one, %10, %10 : vector<4x32xf32>
    %cst_7 = arith.constant 1.000000e+00 : f32
    %12 = vector.broadcast %cst_7 : f32 to vector<4x32xf32>
    %13 = arith.select %11, %12, %10 : vector<4x32xi1>, vector<4x32xf32>
    %c0_8 = arith.constant 0 : index
    %c0_9 = arith.constant 0 : index
    %14 = vector.load %arg4[%c0_8, %c0_9] : memref<32x32xf32, #tpu.memory_space<vmem>>, vector<32x32xf32>
    %cst_10 = arith.constant dense<0.000000e+00> : vector<4x32xf32>
    %15 = tpu.matmul %8, %14, %cst_10 {dimension_numbers = #tpu.dot_dimension_numbers<[1], [0], [0], [1], [0, 0, 1, 1], [], []>} : vector<4x32xf32>, vector<32x32xf32>, vector<4x32xf32> -> vector<4x32xf32>
    %c0_11 = arith.constant 0 : index
    %c0_12 = arith.constant 0 : index
    %16 = vector.load %arg5[%c0_11, %c0_12] : memref<32x32xf32, #tpu.memory_space<vmem>>, vector<32x32xf32>
    %cst_13 = arith.constant dense<0.000000e+00> : vector<4x32xf32>
    %17 = tpu.matmul %13, %16, %cst_13 {dimension_numbers = #tpu.dot_dimension_numbers<[1], [0], [0], [1], [0, 0, 1, 1], [], []>} : vector<4x32xf32>, vector<32x32xf32>, vector<4x32xf32> -> vector<4x32xf32>
    %18 = arith.addf %15, %17 : vector<4x32xf32>
    %c0_14 = arith.constant 0 : index
    %c0_15 = arith.constant 0 : index
    %19 = vector.load %arg6[%c0_14, %c0_15] : memref<1x32xf32, #tpu.memory_space<vmem>>, vector<1x32xf32>
    %20 = vector.broadcast %19 : vector<1x32xf32> to vector<4x32xf32>
    %21 = arith.addf %18, %20 : vector<4x32xf32>
    %c0_16 = arith.constant 0 : index
    %c0_17 = arith.constant 0 : index
    %22 = vector.load %arg7[%c0_16, %c0_17] : memref<32x128xf32, #tpu.memory_space<vmem>>, vector<32x128xf32>
    %c0_18 = arith.constant 0 : index
    %c0_19 = arith.constant 0 : index
    %23 = vector.load %arg8[%c0_18, %c0_19] : memref<32x128xf32, #tpu.memory_space<vmem>>, vector<32x128xf32>
    %c0_20 = arith.constant 0 : index
    %c0_21 = arith.constant 0 : index
    %24 = vector.load %arg9[%c0_20, %c0_21] : memref<1x128xf32, #tpu.memory_space<vmem>>, vector<1x128xf32>
    %cst_22 = arith.constant dense<0.000000e+00> : vector<4x128xf32>
    %25 = tpu.matmul %21, %22, %cst_22 {dimension_numbers = #tpu.dot_dimension_numbers<[1], [0], [0], [1], [0, 0, 1, 1], [], []>} : vector<4x32xf32>, vector<32x128xf32>, vector<4x128xf32> -> vector<4x128xf32>
    %26 = vector.broadcast %24 : vector<1x128xf32> to vector<4x128xf32>
    %27 = arith.addf %25, %26 : vector<4x128xf32>
    %cst_23 = arith.constant 0.000000e+00 : f32
    %28 = vector.broadcast %cst_23 : f32 to vector<1x32xf32>
    %cst_24 = arith.constant 0.000000e+00 : f32
    %29 = vector.broadcast %cst_24 : f32 to vector<1x32xf32>
    %30 = vector.extract_strided_slice %27 {offsets = [0, 0], sizes = [1, 128], strides = [1, 1]} : vector<4x128xf32> to vector<1x128xf32>
    %cst_25 = arith.constant dense<0.000000e+00> : vector<1x128xf32>
    %31 = tpu.matmul %28, %23, %cst_25 {dimension_numbers = #tpu.dot_dimension_numbers<[1], [0], [0], [1], [0, 0, 1, 1], [], []>} : vector<1x32xf32>, vector<32x128xf32>, vector<1x128xf32> -> vector<1x128xf32>
    %32 = arith.addf %30, %31 : vector<1x128xf32>
    %33 = arith.negf %32 : vector<1x128xf32>
    %34 = math.exp %33 : vector<1x128xf32>
    %cst_26 = arith.constant 1.000000e+00 : f32
    %35 = vector.broadcast %cst_26 : f32 to vector<1x128xf32>
    %36 = arith.addf %35, %34 : vector<1x128xf32>
    %37 = arith.divf %35, %36 : vector<1x128xf32>
    %38 = math.tanh %32 : vector<1x128xf32>
    %39 = vector.extract_strided_slice %37 {offsets = [0, 0], sizes = [1, 32], strides = [1, 1]} : vector<1x128xf32> to vector<1x32xf32>
    %40 = vector.extract_strided_slice %37 {offsets = [0, 32], sizes = [1, 32], strides = [1, 1]} : vector<1x128xf32> to vector<1x32xf32>
    %41 = vector.extract_strided_slice %38 {offsets = [0, 64], sizes = [1, 32], strides = [1, 1]} : vector<1x128xf32> to vector<1x32xf32>
    %42 = vector.extract_strided_slice %37 {offsets = [0, 96], sizes = [1, 32], strides = [1, 1]} : vector<1x128xf32> to vector<1x32xf32>
    %43 = arith.mulf %40, %29 : vector<1x32xf32>
    %44 = arith.mulf %39, %41 : vector<1x32xf32>
    %45 = arith.addf %43, %44 : vector<1x32xf32>
    %46 = math.tanh %45 : vector<1x32xf32>
    %47 = arith.mulf %42, %46 : vector<1x32xf32>
    %48 = vector.extract_strided_slice %27 {offsets = [1, 0], sizes = [1, 128], strides = [1, 1]} : vector<4x128xf32> to vector<1x128xf32>
    %cst_27 = arith.constant dense<0.000000e+00> : vector<1x128xf32>
    %49 = tpu.matmul %47, %23, %cst_27 {dimension_numbers = #tpu.dot_dimension_numbers<[1], [0], [0], [1], [0, 0, 1, 1], [], []>} : vector<1x32xf32>, vector<32x128xf32>, vector<1x128xf32> -> vector<1x128xf32>
    %50 = arith.addf %48, %49 : vector<1x128xf32>
    %51 = arith.negf %50 : vector<1x128xf32>
    %52 = math.exp %51 : vector<1x128xf32>
    %cst_28 = arith.constant 1.000000e+00 : f32
    %53 = vector.broadcast %cst_28 : f32 to vector<1x128xf32>
    %54 = arith.addf %53, %52 : vector<1x128xf32>
    %55 = arith.divf %53, %54 : vector<1x128xf32>
    %56 = math.tanh %50 : vector<1x128xf32>
    %57 = vector.extract_strided_slice %55 {offsets = [0, 0], sizes = [1, 32], strides = [1, 1]} : vector<1x128xf32> to vector<1x32xf32>
    %58 = vector.extract_strided_slice %55 {offsets = [0, 32], sizes = [1, 32], strides = [1, 1]} : vector<1x128xf32> to vector<1x32xf32>
    %59 = vector.extract_strided_slice %56 {offsets = [0, 64], sizes = [1, 32], strides = [1, 1]} : vector<1x128xf32> to vector<1x32xf32>
    %60 = vector.extract_strided_slice %55 {offsets = [0, 96], sizes = [1, 32], strides = [1, 1]} : vector<1x128xf32> to vector<1x32xf32>
    %61 = arith.mulf %58, %45 : vector<1x32xf32>
    %62 = arith.mulf %57, %59 : vector<1x32xf32>
    %63 = arith.addf %61, %62 : vector<1x32xf32>
    %64 = math.tanh %63 : vector<1x32xf32>
    %65 = arith.mulf %60, %64 : vector<1x32xf32>
    %66 = vector.extract_strided_slice %27 {offsets = [2, 0], sizes = [1, 128], strides = [1, 1]} : vector<4x128xf32> to vector<1x128xf32>
    %cst_29 = arith.constant dense<0.000000e+00> : vector<1x128xf32>
    %67 = tpu.matmul %65, %23, %cst_29 {dimension_numbers = #tpu.dot_dimension_numbers<[1], [0], [0], [1], [0, 0, 1, 1], [], []>} : vector<1x32xf32>, vector<32x128xf32>, vector<1x128xf32> -> vector<1x128xf32>
    %68 = arith.addf %66, %67 : vector<1x128xf32>
    %69 = arith.negf %68 : vector<1x128xf32>
    %70 = math.exp %69 : vector<1x128xf32>
    %cst_30 = arith.constant 1.000000e+00 : f32
    %71 = vector.broadcast %cst_30 : f32 to vector<1x128xf32>
    %72 = arith.addf %71, %70 : vector<1x128xf32>
    %73 = arith.divf %71, %72 : vector<1x128xf32>
    %74 = math.tanh %68 : vector<1x128xf32>
    %75 = vector.extract_strided_slice %73 {offsets = [0, 0], sizes = [1, 32], strides = [1, 1]} : vector<1x128xf32> to vector<1x32xf32>
    %76 = vector.extract_strided_slice %73 {offsets = [0, 32], sizes = [1, 32], strides = [1, 1]} : vector<1x128xf32> to vector<1x32xf32>
    %77 = vector.extract_strided_slice %74 {offsets = [0, 64], sizes = [1, 32], strides = [1, 1]} : vector<1x128xf32> to vector<1x32xf32>
    %78 = vector.extract_strided_slice %73 {offsets = [0, 96], sizes = [1, 32], strides = [1, 1]} : vector<1x128xf32> to vector<1x32xf32>
    %79 = arith.mulf %76, %63 : vector<1x32xf32>
    %80 = arith.mulf %75, %77 : vector<1x32xf32>
    %81 = arith.addf %79, %80 : vector<1x32xf32>
    %82 = math.tanh %81 : vector<1x32xf32>
    %83 = arith.mulf %78, %82 : vector<1x32xf32>
    %84 = vector.extract_strided_slice %27 {offsets = [3, 0], sizes = [1, 128], strides = [1, 1]} : vector<4x128xf32> to vector<1x128xf32>
    %cst_31 = arith.constant dense<0.000000e+00> : vector<1x128xf32>
    %85 = tpu.matmul %83, %23, %cst_31 {dimension_numbers = #tpu.dot_dimension_numbers<[1], [0], [0], [1], [0, 0, 1, 1], [], []>} : vector<1x32xf32>, vector<32x128xf32>, vector<1x128xf32> -> vector<1x128xf32>
    %86 = arith.addf %84, %85 : vector<1x128xf32>
    %87 = arith.negf %86 : vector<1x128xf32>
    %88 = math.exp %87 : vector<1x128xf32>
    %cst_32 = arith.constant 1.000000e+00 : f32
    %89 = vector.broadcast %cst_32 : f32 to vector<1x128xf32>
    %90 = arith.addf %89, %88 : vector<1x128xf32>
    %91 = arith.divf %89, %90 : vector<1x128xf32>
    %92 = math.tanh %86 : vector<1x128xf32>
    %93 = vector.extract_strided_slice %91 {offsets = [0, 0], sizes = [1, 32], strides = [1, 1]} : vector<1x128xf32> to vector<1x32xf32>
    %94 = vector.extract_strided_slice %91 {offsets = [0, 32], sizes = [1, 32], strides = [1, 1]} : vector<1x128xf32> to vector<1x32xf32>
    %95 = vector.extract_strided_slice %92 {offsets = [0, 64], sizes = [1, 32], strides = [1, 1]} : vector<1x128xf32> to vector<1x32xf32>
    %96 = vector.extract_strided_slice %91 {offsets = [0, 96], sizes = [1, 32], strides = [1, 1]} : vector<1x128xf32> to vector<1x32xf32>
    %97 = arith.mulf %94, %81 : vector<1x32xf32>
    %98 = arith.mulf %93, %95 : vector<1x32xf32>
    %99 = arith.addf %97, %98 : vector<1x32xf32>
    %100 = math.tanh %99 : vector<1x32xf32>
    %101 = arith.mulf %96, %100 : vector<1x32xf32>
    %102 = tpu.concatenate %47, %65, %83, %101 in 0 : vector<1x32xf32>, vector<1x32xf32>, vector<1x32xf32>, vector<1x32xf32> -> vector<4x32xf32>
    %c0_33 = arith.constant 0 : index
    %c0_34 = arith.constant 0 : index
    %103 = vector.load %arg10[%c0_33, %c0_34] : memref<32x128xf32, #tpu.memory_space<vmem>>, vector<32x128xf32>
    %c0_35 = arith.constant 0 : index
    %c0_36 = arith.constant 0 : index
    %104 = vector.load %arg11[%c0_35, %c0_36] : memref<32x128xf32, #tpu.memory_space<vmem>>, vector<32x128xf32>
    %c0_37 = arith.constant 0 : index
    %c0_38 = arith.constant 0 : index
    %105 = vector.load %arg12[%c0_37, %c0_38] : memref<1x128xf32, #tpu.memory_space<vmem>>, vector<1x128xf32>
    %cst_39 = arith.constant dense<0.000000e+00> : vector<4x128xf32>
    %106 = tpu.matmul %102, %103, %cst_39 {dimension_numbers = #tpu.dot_dimension_numbers<[1], [0], [0], [1], [0, 0, 1, 1], [], []>} : vector<4x32xf32>, vector<32x128xf32>, vector<4x128xf32> -> vector<4x128xf32>
    %107 = vector.broadcast %105 : vector<1x128xf32> to vector<4x128xf32>
    %108 = arith.addf %106, %107 : vector<4x128xf32>
    %cst_40 = arith.constant 0.000000e+00 : f32
    %109 = vector.broadcast %cst_40 : f32 to vector<1x32xf32>
    %cst_41 = arith.constant 0.000000e+00 : f32
    %110 = vector.broadcast %cst_41 : f32 to vector<1x32xf32>
    %111 = vector.extract_strided_slice %108 {offsets = [0, 0], sizes = [1, 128], strides = [1, 1]} : vector<4x128xf32> to vector<1x128xf32>
    %cst_42 = arith.constant dense<0.000000e+00> : vector<1x128xf32>
    %112 = tpu.matmul %109, %104, %cst_42 {dimension_numbers = #tpu.dot_dimension_numbers<[1], [0], [0], [1], [0, 0, 1, 1], [], []>} : vector<1x32xf32>, vector<32x128xf32>, vector<1x128xf32> -> vector<1x128xf32>
    %113 = arith.addf %111, %112 : vector<1x128xf32>
    %114 = arith.negf %113 : vector<1x128xf32>
    %115 = math.exp %114 : vector<1x128xf32>
    %cst_43 = arith.constant 1.000000e+00 : f32
    %116 = vector.broadcast %cst_43 : f32 to vector<1x128xf32>
    %117 = arith.addf %116, %115 : vector<1x128xf32>
    %118 = arith.divf %116, %117 : vector<1x128xf32>
    %119 = math.tanh %113 : vector<1x128xf32>
    %120 = vector.extract_strided_slice %118 {offsets = [0, 0], sizes = [1, 32], strides = [1, 1]} : vector<1x128xf32> to vector<1x32xf32>
    %121 = vector.extract_strided_slice %118 {offsets = [0, 32], sizes = [1, 32], strides = [1, 1]} : vector<1x128xf32> to vector<1x32xf32>
    %122 = vector.extract_strided_slice %119 {offsets = [0, 64], sizes = [1, 32], strides = [1, 1]} : vector<1x128xf32> to vector<1x32xf32>
    %123 = vector.extract_strided_slice %118 {offsets = [0, 96], sizes = [1, 32], strides = [1, 1]} : vector<1x128xf32> to vector<1x32xf32>
    %124 = arith.mulf %121, %110 : vector<1x32xf32>
    %125 = arith.mulf %120, %122 : vector<1x32xf32>
    %126 = arith.addf %124, %125 : vector<1x32xf32>
    %127 = math.tanh %126 : vector<1x32xf32>
    %128 = arith.mulf %123, %127 : vector<1x32xf32>
    %129 = vector.extract_strided_slice %108 {offsets = [1, 0], sizes = [1, 128], strides = [1, 1]} : vector<4x128xf32> to vector<1x128xf32>
    %cst_44 = arith.constant dense<0.000000e+00> : vector<1x128xf32>
    %130 = tpu.matmul %128, %104, %cst_44 {dimension_numbers = #tpu.dot_dimension_numbers<[1], [0], [0], [1], [0, 0, 1, 1], [], []>} : vector<1x32xf32>, vector<32x128xf32>, vector<1x128xf32> -> vector<1x128xf32>
    %131 = arith.addf %129, %130 : vector<1x128xf32>
    %132 = arith.negf %131 : vector<1x128xf32>
    %133 = math.exp %132 : vector<1x128xf32>
    %cst_45 = arith.constant 1.000000e+00 : f32
    %134 = vector.broadcast %cst_45 : f32 to vector<1x128xf32>
    %135 = arith.addf %134, %133 : vector<1x128xf32>
    %136 = arith.divf %134, %135 : vector<1x128xf32>
    %137 = math.tanh %131 : vector<1x128xf32>
    %138 = vector.extract_strided_slice %136 {offsets = [0, 0], sizes = [1, 32], strides = [1, 1]} : vector<1x128xf32> to vector<1x32xf32>
    %139 = vector.extract_strided_slice %136 {offsets = [0, 32], sizes = [1, 32], strides = [1, 1]} : vector<1x128xf32> to vector<1x32xf32>
    %140 = vector.extract_strided_slice %137 {offsets = [0, 64], sizes = [1, 32], strides = [1, 1]} : vector<1x128xf32> to vector<1x32xf32>
    %141 = vector.extract_strided_slice %136 {offsets = [0, 96], sizes = [1, 32], strides = [1, 1]} : vector<1x128xf32> to vector<1x32xf32>
    %142 = arith.mulf %139, %126 : vector<1x32xf32>
    %143 = arith.mulf %138, %140 : vector<1x32xf32>
    %144 = arith.addf %142, %143 : vector<1x32xf32>
    %145 = math.tanh %144 : vector<1x32xf32>
    %146 = arith.mulf %141, %145 : vector<1x32xf32>
    %147 = vector.extract_strided_slice %108 {offsets = [2, 0], sizes = [1, 128], strides = [1, 1]} : vector<4x128xf32> to vector<1x128xf32>
    %cst_46 = arith.constant dense<0.000000e+00> : vector<1x128xf32>
    %148 = tpu.matmul %146, %104, %cst_46 {dimension_numbers = #tpu.dot_dimension_numbers<[1], [0], [0], [1], [0, 0, 1, 1], [], []>} : vector<1x32xf32>, vector<32x128xf32>, vector<1x128xf32> -> vector<1x128xf32>
    %149 = arith.addf %147, %148 : vector<1x128xf32>
    %150 = arith.negf %149 : vector<1x128xf32>
    %151 = math.exp %150 : vector<1x128xf32>
    %cst_47 = arith.constant 1.000000e+00 : f32
    %152 = vector.broadcast %cst_47 : f32 to vector<1x128xf32>
    %153 = arith.addf %152, %151 : vector<1x128xf32>
    %154 = arith.divf %152, %153 : vector<1x128xf32>
    %155 = math.tanh %149 : vector<1x128xf32>
    %156 = vector.extract_strided_slice %154 {offsets = [0, 0], sizes = [1, 32], strides = [1, 1]} : vector<1x128xf32> to vector<1x32xf32>
    %157 = vector.extract_strided_slice %154 {offsets = [0, 32], sizes = [1, 32], strides = [1, 1]} : vector<1x128xf32> to vector<1x32xf32>
    %158 = vector.extract_strided_slice %155 {offsets = [0, 64], sizes = [1, 32], strides = [1, 1]} : vector<1x128xf32> to vector<1x32xf32>
    %159 = vector.extract_strided_slice %154 {offsets = [0, 96], sizes = [1, 32], strides = [1, 1]} : vector<1x128xf32> to vector<1x32xf32>
    %160 = arith.mulf %157, %144 : vector<1x32xf32>
    %161 = arith.mulf %156, %158 : vector<1x32xf32>
    %162 = arith.addf %160, %161 : vector<1x32xf32>
    %163 = math.tanh %162 : vector<1x32xf32>
    %164 = arith.mulf %159, %163 : vector<1x32xf32>
    %165 = vector.extract_strided_slice %108 {offsets = [3, 0], sizes = [1, 128], strides = [1, 1]} : vector<4x128xf32> to vector<1x128xf32>
    %cst_48 = arith.constant dense<0.000000e+00> : vector<1x128xf32>
    %166 = tpu.matmul %164, %104, %cst_48 {dimension_numbers = #tpu.dot_dimension_numbers<[1], [0], [0], [1], [0, 0, 1, 1], [], []>} : vector<1x32xf32>, vector<32x128xf32>, vector<1x128xf32> -> vector<1x128xf32>
    %167 = arith.addf %165, %166 : vector<1x128xf32>
    %168 = arith.negf %167 : vector<1x128xf32>
    %169 = math.exp %168 : vector<1x128xf32>
    %cst_49 = arith.constant 1.000000e+00 : f32
    %170 = vector.broadcast %cst_49 : f32 to vector<1x128xf32>
    %171 = arith.addf %170, %169 : vector<1x128xf32>
    %172 = arith.divf %170, %171 : vector<1x128xf32>
    %173 = math.tanh %167 : vector<1x128xf32>
    %174 = vector.extract_strided_slice %172 {offsets = [0, 0], sizes = [1, 32], strides = [1, 1]} : vector<1x128xf32> to vector<1x32xf32>
    %175 = vector.extract_strided_slice %172 {offsets = [0, 32], sizes = [1, 32], strides = [1, 1]} : vector<1x128xf32> to vector<1x32xf32>
    %176 = vector.extract_strided_slice %173 {offsets = [0, 64], sizes = [1, 32], strides = [1, 1]} : vector<1x128xf32> to vector<1x32xf32>
    %177 = vector.extract_strided_slice %172 {offsets = [0, 96], sizes = [1, 32], strides = [1, 1]} : vector<1x128xf32> to vector<1x32xf32>
    %178 = arith.mulf %175, %162 : vector<1x32xf32>
    %179 = arith.mulf %174, %176 : vector<1x32xf32>
    %180 = arith.addf %178, %179 : vector<1x32xf32>
    %181 = math.tanh %180 : vector<1x32xf32>
    %182 = arith.mulf %177, %181 : vector<1x32xf32>
    %183 = tpu.concatenate %128, %146, %164, %182 in 1 : vector<1x32xf32>, vector<1x32xf32>, vector<1x32xf32>, vector<1x32xf32> -> vector<1x128xf32>
    %c0_50 = arith.constant 0 : index
    %c0_51 = arith.constant 0 : index
    %c0_52 = arith.constant 0 : index
    %184 = vector.load %arg13[%c0_50, %c0_51, %c0_52] : memref<1x1x128xf32, #tpu.memory_space<vmem>>, vector<1x1x128xf32>
    %185 = vector.shape_cast %184 : vector<1x1x128xf32> to vector<1x128xf32>
    %186 = vector.shape_cast %183 : vector<1x128xf32> to vector<1x1x128xf32>
    tpu.vector_store %arg13[%c0_50, %c0_51, %c0_52], %186 {strides = array<i32>} : memref<1x1x128xf32, #tpu.memory_space<vmem>>, vector<1x1x128xf32>,
    return
  }
  func.func @transform_0(%arg0: i32) -> (i32, i32, i32) {
    %c0_i32 = arith.constant 0 : i32
    %c0_i32_0 = arith.constant 0 : i32
    %c0_i32_1 = arith.constant 0 : i32
    return %arg0, %c0_i32, %c0_i32_0 : i32, i32, i32
  }
  func.func @transform_1(%arg0: i32) -> (i32, i32, i32) {
    %c0_i32 = arith.constant 0 : i32
    %c0_i32_0 = arith.constant 0 : i32
    %c0_i32_1 = arith.constant 0 : i32
    return %arg0, %c0_i32, %c0_i32_0 : i32, i32, i32
  }
  func.func @transform_2(%arg0: i32) -> (i32, i32) {
    %c0_i32 = arith.constant 0 : i32
    %c0_i32_0 = arith.constant 0 : i32
    %c0_i32_1 = arith.constant 0 : i32
    return %c0_i32, %c0_i32_0 : i32, i32
  }
  func.func @transform_3(%arg0: i32) -> (i32, i32) {
    %c0_i32 = arith.constant 0 : i32
    %c0_i32_0 = arith.constant 0 : i32
    %c0_i32_1 = arith.constant 0 : i32
    return %c0_i32, %c0_i32_0 : i32, i32
  }
  func.func @transform_4(%arg0: i32) -> (i32, i32) {
    %c0_i32 = arith.constant 0 : i32
    %c0_i32_0 = arith.constant 0 : i32
    %c0_i32_1 = arith.constant 0 : i32
    return %c0_i32, %c0_i32_0 : i32, i32
  }
  func.func @transform_5(%arg0: i32) -> (i32, i32) {
    %c0_i32 = arith.constant 0 : i32
    %c0_i32_0 = arith.constant 0 : i32
    %c0_i32_1 = arith.constant 0 : i32
    return %c0_i32, %c0_i32_0 : i32, i32
  }
  func.func @transform_6(%arg0: i32) -> (i32, i32) {
    %c0_i32 = arith.constant 0 : i32
    %c0_i32_0 = arith.constant 0 : i32
    %c0_i32_1 = arith.constant 0 : i32
    return %c0_i32, %c0_i32_0 : i32, i32
  }
  func.func @transform_7(%arg0: i32) -> (i32, i32) {
    %c0_i32 = arith.constant 0 : i32
    %c0_i32_0 = arith.constant 0 : i32
    %c0_i32_1 = arith.constant 0 : i32
    return %c0_i32, %c0_i32_0 : i32, i32
  }
  func.func @transform_8(%arg0: i32) -> (i32, i32) {
    %c0_i32 = arith.constant 0 : i32
    %c0_i32_0 = arith.constant 0 : i32
    %c0_i32_1 = arith.constant 0 : i32
    return %c0_i32, %c0_i32_0 : i32, i32
  }
  func.func @transform_9(%arg0: i32) -> (i32, i32) {
    %c0_i32 = arith.constant 0 : i32
    %c0_i32_0 = arith.constant 0 : i32
    %c0_i32_1 = arith.constant 0 : i32
    return %c0_i32, %c0_i32_0 : i32, i32
  }
  func.func @transform_10(%arg0: i32) -> (i32, i32) {
    %c0_i32 = arith.constant 0 : i32
    %c0_i32_0 = arith.constant 0 : i32
    %c0_i32_1 = arith.constant 0 : i32
    return %c0_i32, %c0_i32_0 : i32, i32
  }
  func.func @transform_11(%arg0: i32) -> (i32, i32) {
    %c0_i32 = arith.constant 0 : i32
    %c0_i32_0 = arith.constant 0 : i32
    %c0_i32_1 = arith.constant 0 : i32
    return %c0_i32, %c0_i32_0 : i32, i32
  }
  func.func @transform_12(%arg0: i32) -> (i32, i32, i32) {
    %c0_i32 = arith.constant 0 : i32
    %c0_i32_0 = arith.constant 0 : i32
    %c0_i32_1 = arith.constant 0 : i32
    return %arg0, %c0_i32, %c0_i32_0 : i32, i32, i32
  }
}

</mosaic_0001>

<llo_original>
// kernel: _forward_jit.1
$region0: #{_forward_jit.1}
  #allocation0 [shape = 'u32[]', space=smem, size = 0x4, offset = 0x4, fixed_abs, tag = 'smem constant byte address 0x4 - core index']
  #allocation1 [shape = 'u32[144,128]{1,0:T(1,128)}', space=vmem, size = 0x12000, scoped, tag = 'internal scratch']
  %s0 = inlined_call_operand.vmem [shape: s32[2,4,1], index: 0, kind: input, shape index: {}]
  %s1 = inlined_call_operand.vmem [shape: f32[2,4,32], index: 1, kind: input, shape index: {}]
  %s2 = inlined_call_operand.vmem [shape: f32[10,32], index: 2, kind: input, shape index: {}]
  %s3 = inlined_call_operand.vmem [shape: f32[32,32], index: 3, kind: input, shape index: {}]
  %s4 = inlined_call_operand.vmem [shape: f32[32,32], index: 4, kind: input, shape index: {}]
  %s5 = inlined_call_operand.vmem [shape: f32[1,32], index: 5, kind: input, shape index: {}]
  %s6 = inlined_call_operand.vmem [shape: f32[32,128], index: 6, kind: input, shape index: {}]
  %s7 = inlined_call_operand.vmem [shape: f32[32,128], index: 7, kind: input, shape index: {}]
  %s8 = inlined_call_operand.vmem [shape: f32[1,128], index: 8, kind: input, shape index: {}]
  %s9 = inlined_call_operand.vmem [shape: f32[32,128], index: 9, kind: input, shape index: {}]
  %s10 = inlined_call_operand.vmem [shape: f32[32,128], index: 10, kind: input, shape index: {}]
  %s11 = inlined_call_operand.vmem [shape: f32[1,128], index: 11, kind: input, shape index: {}]
  %s12 = inlined_call_operand.vmem [shape: f32[2,1,128], index: 12, kind: output, shape index: {}]
  %s13 = sld [smem:[#allocation0]]
  $region81: #{_forward_jit.1} parent=0
    _
  %s15 = ssub.s32 1, %s13
  %s16 = scalar_select 0, %s15, %s13
  loop: start=0, step=1, limit=4
  $region2: #{_forward_jit.1} parent=0 // loop_pre_header
    _
  $region3: #{_forward_jit.1} parent=0 // loop_header
    %s18 = sphi 0, %s22
    %p19 = scmp.ge.s32.totalorder %s18, 4
    %s28 = sphi 0, %s30
    %s31 = sphi 0, %s28
    %s32 = sphi 0, %s31
    %s48 = sphi 0, %s32
    %s54 = sphi 0, %s56
    %s57 = sphi 0, %s54
    %s58 = sphi 0, %s57
    %s74 = sphi 0, %s58
    %s78 = sphi 0, %s78
    %s80 = sphi 0, %s78
    %s81 = sphi 0, %s80
    %s95 = sphi 0, %s81
    %s99 = sphi 0, %s99
    %s101 = sphi 0, %s99
    %s102 = sphi 0, %s101
    %s116 = sphi 0, %s102
    %s120 = sphi 0, %s120
    %s122 = sphi 0, %s120
    %s123 = sphi 0, %s122
    %s137 = sphi 0, %s123
    %s141 = sphi 0, %s141
    %s143 = sphi 0, %s141
    %s144 = sphi 0, %s143
    %s158 = sphi 0, %s144
    %s162 = sphi 0, %s162
    %s164 = sphi 0, %s162
    %s165 = sphi 0, %s164
    %s179 = sphi 0, %s165
    %s183 = sphi 0, %s183
    %s185 = sphi 0, %s183
    %s186 = sphi 0, %s185
    %s200 = sphi 0, %s186
    %s204 = sphi 0, %s204
    %s206 = sphi 0, %s204
    %s207 = sphi 0, %s206
    %s221 = sphi 0, %s207
    %s225 = sphi 0, %s225
    %s227 = sphi 0, %s225
    %s228 = sphi 0, %s227
    %s242 = sphi 0, %s228
    %s246 = sphi 0, %s246
    %s248 = sphi 0, %s246
    %s249 = sphi 0, %s248
    %s263 = sphi 0, %s249
    %s267 = sphi 0, %s267
    %s269 = sphi 0, %s267
    %s270 = sphi 0, %s269
    %s284 = sphi 0, %s270
    %s290 = sphi 0, %s292
    %s293 = sphi 0, %s290
    %s294 = sphi 0, %s293
    %s310 = sphi 0, %s294
  $region4: #{_forward_jit.1} parent=0 // loop_header_branch
    %21 = sbr.rel (%p19) target = $region8
  $region5: #{_forward_jit.1} parent=0 // loop_body
    %s23 = ssub.s32 %s18, 1
    %s24 = ssub.s32 %s18, 2
    %s25 = sadd.s32 %s18, 1
    %s26 = ssub.s32 %s18, %s25
    %p27 = scmp.eq.s32.totalorder %s26, 0
    %s29 = sadd.s32 %s28, 1
    %s30 = scalar_select %p27, %s28, %s29
    %p33 = pneg %p27
    %p34 = scmp.eq.s32.totalorder %s18, 1
    %p35 = por %p33, %p34
    %p36 = scmp.ne.s32.totalorder %s28, %s31
    %p37 = scmp.eq.s32.totalorder %s18, 0
    %p38 = por %p36, %p37
    %p39 = scmp.ne.s32.totalorder %s28, %s31
    %p40 = scmp.eq.s32.totalorder %s23, 1
    %p41 = por %p39, %p40
    %p42 = scmp.ne.s32.totalorder %s31, %s32
    %p43 = scmp.eq.s32.totalorder %s23, 0
    %p44 = por %p42, %p43
    %p45 = scmp.ne.s32.totalorder %s31, %s32
    %p46 = scmp.eq.s32.totalorder %s24, 1
    %p47 = por %p45, %p46
    %p49 = scmp.ne.s32.totalorder %s32, %s48
    %p50 = scmp.eq.s32.totalorder %s24, 0
    %p51 = por %p49, %p50
    %s52 = ssub.s32 %s18, %s25
    %p53 = scmp.eq.s32.totalorder %s52, 0
    %s55 = sadd.s32 %s54, 1
    %s56 = scalar_select %p53, %s54, %s55
    %p59 = pneg %p53
    %p60 = scmp.eq.s32.totalorder %s18, 1
    %p61 = por %p59, %p60
    %p62 = scmp.ne.s32.totalorder %s54, %s57
    %p63 = scmp.eq.s32.totalorder %s18, 0
    %p64 = por %p62, %p63
    %p65 = scmp.ne.s32.totalorder %s54, %s57
    %p66 = scmp.eq.s32.totalorder %s23, 1
    %p67 = por %p65, %p66
    %p68 = scmp.ne.s32.totalorder %s57, %s58
    %p69 = scmp.eq.s32.totalorder %s23, 0
    %p70 = por %p68, %p69
    %p71 = scmp.ne.s32.totalorder %s57, %s58
    %p72 = scmp.eq.s32.totalorder %s24, 1
    %p73 = por %p71, %p72
    %p75 = scmp.ne.s32.totalorder %s58, %s74
    %p76 = scmp.eq.s32.totalorder %s24, 0
    %p77 = por %p75, %p76
    %s79 = sadd.s32 %s78, 1
    %p82 = scmp.eq.s32.totalorder %s18, 1
    %p83 = scmp.ne.s32.totalorder %s78, %s80
    %p84 = scmp.eq.s32.totalorder %s18, 0
    %p85 = por %p83, %p84
    %p86 = scmp.ne.s32.totalorder %s78, %s80
    %p87 = scmp.eq.s32.totalorder %s23, 1
    %p88 = por %p86, %p87
    %p89 = scmp.ne.s32.totalorder %s80, %s81
    %p90 = scmp.eq.s32.totalorder %s23, 0
    %p91 = por %p89, %p90
    %p92 = scmp.ne.s32.totalorder %s80, %s81
    %p93 = scmp.eq.s32.totalorder %s24, 1
    %p94 = por %p92, %p93
    %p96 = scmp.ne.s32.totalorder %s81, %s95
    %p97 = scmp.eq.s32.totalorder %s24, 0
    %p98 = por %p96, %p97
    %s100 = sadd.s32 %s99, 1
    %p103 = scmp.eq.s32.totalorder %s18, 1
    %p104 = scmp.ne.s32.totalorder %s99, %s101
    %p105 = scmp.eq.s32.totalorder %s18, 0
    %p106 = por %p104, %p105
    %p107 = scmp.ne.s32.totalorder %s99, %s101
    %p108 = scmp.eq.s32.totalorder %s23, 1
    %p109 = por %p107, %p108
    %p110 = scmp.ne.s32.totalorder %s101, %s102
    %p111 = scmp.eq.s32.totalorder %s23, 0
    %p112 = por %p110, %p111
    %p113 = scmp.ne.s32.totalorder %s101, %s102
    %p114 = scmp.eq.s32.totalorder %s24, 1
    %p115 = por %p113, %p114
    %p117 = scmp.ne.s32.totalorder %s102, %s116
    %p118 = scmp.eq.s32.totalorder %s24, 0
    %p119 = por %p117, %p118
    %s121 = sadd.s32 %s120, 1
    %p124 = scmp.eq.s32.totalorder %s18, 1
    %p125 = scmp.ne.s32.totalorder %s120, %s122
    %p126 = scmp.eq.s32.totalorder %s18, 0
    %p127 = por %p125, %p126
    %p128 = scmp.ne.s32.totalorder %s120, %s122
    %p129 = scmp.eq.s32.totalorder %s23, 1
    %p130 = por %p128, %p129
    %p131 = scmp.ne.s32.totalorder %s122, %s123
    %p132 = scmp.eq.s32.totalorder %s23, 0
    %p133 = por %p131, %p132
    %p134 = scmp.ne.s32.totalorder %s122, %s123
    %p135 = scmp.eq.s32.totalorder %s24, 1
    %p136 = por %p134, %p135
    %p138 = scmp.ne.s32.totalorder %s123, %s137
    %p139 = scmp.eq.s32.totalorder %s24, 0
    %p140 = por %p138, %p139
    %s142 = sadd.s32 %s141, 1
    %p145 = scmp.eq.s32.totalorder %s18, 1
    %p146 = scmp.ne.s32.totalorder %s141, %s143
    %p147 = scmp.eq.s32.totalorder %s18, 0
    %p148 = por %p146, %p147
    %p149 = scmp.ne.s32.totalorder %s141, %s143
    %p150 = scmp.eq.s32.totalorder %s23, 1
    %p151 = por %p149, %p150
    %p152 = scmp.ne.s32.totalorder %s143, %s144
    %p153 = scmp.eq.s32.totalorder %s23, 0
    %p154 = por %p152, %p153
    %p155 = scmp.ne.s32.totalorder %s143, %s144
    %p156 = scmp.eq.s32.totalorder %s24, 1
    %p157 = por %p155, %p156
    %p159 = scmp.ne.s32.totalorder %s144, %s158
    %p160 = scmp.eq.s32.totalorder %s24, 0
    %p161 = por %p159, %p160
    %s163 = sadd.s32 %s162, 1
    %p166 = scmp.eq.s32.totalorder %s18, 1
    %p167 = scmp.ne.s32.totalorder %s162, %s164
    %p168 = scmp.eq.s32.totalorder %s18, 0
    %p169 = por %p167, %p168
    %p170 = scmp.ne.s32.totalorder %s162, %s164
    %p171 = scmp.eq.s32.totalorder %s23, 1
    %p172 = por %p170, %p171
    %p173 = scmp.ne.s32.totalorder %s164, %s165
    %p174 = scmp.eq.s32.totalorder %s23, 0
    %p175 = por %p173, %p174
    %p176 = scmp.ne.s32.totalorder %s164, %s165
    %p177 = scmp.eq.s32.totalorder %s24, 1
    %p178 = por %p176, %p177
    %p180 = scmp.ne.s32.totalorder %s165, %s179
    %p181 = scmp.eq.s32.totalorder %s24, 0
    %p182 = por %p180, %p181
    %s184 = sadd.s32 %s183, 1
    %p187 = scmp.eq.s32.totalorder %s18, 1
    %p188 = scmp.ne.s32.totalorder %s183, %s185
    %p189 = scmp.eq.s32.totalorder %s18, 0
    %p190 = por %p188, %p189
    %p191 = scmp.ne.s32.totalorder %s183, %s185
    %p192 = scmp.eq.s32.totalorder %s23, 1
    %p193 = por %p191, %p192
    %p194 = scmp.ne.s32.totalorder %s185, %s186
    %p195 = scmp.eq.s32.totalorder %s23, 0
    %p196 = por %p194, %p195
    %p197 = scmp.ne.s32.totalorder %s185, %s186
    %p198 = scmp.eq.s32.totalorder %s24, 1
    %p199 = por %p197, %p198
    %p201 = scmp.ne.s32.totalorder %s186, %s200
    %p202 = scmp.eq.s32.totalorder %s24, 0
    %p203 = por %p201, %p202
    %s205 = sadd.s32 %s204, 1
    %p208 = scmp.eq.s32.totalorder %s18, 1
    %p209 = scmp.ne.s32.totalorder %s204, %s206
    %p210 = scmp.eq.s32.totalorder %s18, 0
    %p211 = por %p209, %p210
    %p212 = scmp.ne.s32.totalorder %s204, %s206
    %p213 = scmp.eq.s32.totalorder %s23, 1
    %p214 = por %p212, %p213
    %p215 = scmp.ne.s32.totalorder %s206, %s207
    %p216 = scmp.eq.s32.totalorder %s23, 0
    %p217 = por %p215, %p216
    %p218 = scmp.ne.s32.totalorder %s206, %s207
    %p219 = scmp.eq.s32.totalorder %s24, 1
    %p220 = por %p218, %p219
    %p222 = scmp.ne.s32.totalorder %s207, %s221
    %p223 = scmp.eq.s32.totalorder %s24, 0
    %p224 = por %p222, %p223
    %s226 = sadd.s32 %s225, 1
    %p229 = scmp.eq.s32.totalorder %s18, 1
    %p230 = scmp.ne.s32.totalorder %s225, %s227
    %p231 = scmp.eq.s32.totalorder %s18, 0
    %p232 = por %p230, %p231
    %p233 = scmp.ne.s32.totalorder %s225, %s227
    %p234 = scmp.eq.s32.totalorder %s23, 1
    %p235 = por %p233, %p234
    %p236 = scmp.ne.s32.totalorder %s227, %s228
    %p237 = scmp.eq.s32.totalorder %s23, 0
    %p238 = por %p236, %p237
    %p239 = scmp.ne.s32.totalorder %s227, %s228
    %p240 = scmp.eq.s32.totalorder %s24, 1
    %p241 = por %p239, %p240
    %p243 = scmp.ne.s32.totalorder %s228, %s242
    %p244 = scmp.eq.s32.totalorder %s24, 0
    %p245 = por %p243, %p244
    %s247 = sadd.s32 %s246, 1
    %p250 = scmp.eq.s32.totalorder %s18, 1
    %p251 = scmp.ne.s32.totalorder %s246, %s248
    %p252 = scmp.eq.s32.totalorder %s18, 0
    %p253 = por %p251, %p252
    %p254 = scmp.ne.s32.totalorder %s246, %s248
    %p255 = scmp.eq.s32.totalorder %s23, 1
    %p256 = por %p254, %p255
    %p257 = scmp.ne.s32.totalorder %s248, %s249
    %p258 = scmp.eq.s32.totalorder %s23, 0
    %p259 = por %p257, %p258
    %p260 = scmp.ne.s32.totalorder %s248, %s249
    %p261 = scmp.eq.s32.totalorder %s24, 1
    %p262 = por %p260, %p261
    %p264 = scmp.ne.s32.totalorder %s249, %s263
    %p265 = scmp.eq.s32.totalorder %s24, 0
    %p266 = por %p264, %p265
    %s268 = sadd.s32 %s267, 1
    %p271 = scmp.eq.s32.totalorder %s18, 1
    %p272 = scmp.ne.s32.totalorder %s267, %s269
    %p273 = scmp.eq.s32.totalorder %s18, 0
    %p274 = por %p272, %p273
    %p275 = scmp.ne.s32.totalorder %s267, %s269
    %p276 = scmp.eq.s32.totalorder %s23, 1
    %p277 = por %p275, %p276
    %p278 = scmp.ne.s32.totalorder %s269, %s270
    %p279 = scmp.eq.s32.totalorder %s23, 0
    %p280 = por %p278, %p279
    %p281 = scmp.ne.s32.totalorder %s269, %s270
    %p282 = scmp.eq.s32.totalorder %s24, 1
    %p283 = por %p281, %p282
    %p285 = scmp.ne.s32.totalorder %s270, %s284
    %p286 = scmp.eq.s32.totalorder %s24, 0
    %p287 = por %p285, %p286
    %s288 = ssub.s32 %s18, %s25
    %p289 = scmp.eq.s32.totalorder %s288, 0
    %s291 = sadd.s32 %s290, 1
    %s292 = scalar_select %p289, %s290, %s291
    %p295 = pneg %p289
    %p296 = scmp.eq.s32.totalorder %s18, 1
    %p297 = por %p295, %p296
    %p298 = scmp.ne.s32.totalorder %s290, %s293
    %p299 = scmp.eq.s32.totalorder %s18, 0
    %p300 = por %p298, %p299
    %p301 = scmp.ne.s32.totalorder %s290, %s293
    %p302 = scmp.eq.s32.totalorder %s23, 1
    %p303 = por %p301, %p302
    %p304 = scmp.ne.s32.totalorder %s293, %s294
    %p305 = scmp.eq.s32.totalorder %s23, 0
    %p306 = por %p304, %p305
    %p307 = scmp.ne.s32.totalorder %s293, %s294
    %p308 = scmp.eq.s32.totalorder %s24, 1
    %p309 = por %p307, %p308
    %p311 = scmp.ne.s32.totalorder %s294, %s310
    %p312 = scmp.eq.s32.totalorder %s24, 0
    %p313 = por %p311, %p312
    %p314 = scmp.le.s32.totalorder 1, %s18
    %p315 = scmp.lt.s32.totalorder %s18, 3
    %p316 = pnand %p314, %p315
    %p317 = pneg %p316
    // Predicated region
    $region9: #{_forward_jit.1} parent=5 // pred_check
      _
    $region10: #{_forward_jit.1} parent=5 // pred_check_branch
      %319 = sbr.rel (%p316) target = $region12
    $region11: #{_forward_jit.1} parent=5 // pred_region
      %s320 = ssub.s32 %s18, 1
      // Predicated region
      $region13: #{_forward_jit.1} parent=11 // pred_check
        %p321 = pneg %p91
      $region14: #{_forward_jit.1} parent=11 // pred_check_branch
        %323 = sbr.rel (%p321) target = $region16
      $region15: #{_forward_jit.1} parent=11 // pred_region
        _
      $region16: #{_forward_jit.1} parent=11 // pred_fallthru
        _
      // Predicated region
      $region17: #{_forward_jit.1} parent=11 // pred_check
        %p324 = pneg %p112
      $region18: #{_forward_jit.1} parent=11 // pred_check_branch
        %326 = sbr.rel (%p324) target = $region20
      $region19: #{_forward_jit.1} parent=11 // pred_region
        _
      $region20: #{_forward_jit.1} parent=11 // pred_fallthru
        _
      // Predicated region
      $region21: #{_forward_jit.1} parent=11 // pred_check
        %p327 = pneg %p133
      $region22: #{_forward_jit.1} parent=11 // pred_check_branch
        %329 = sbr.rel (%p327) target = $region24
      $region23: #{_forward_jit.1} parent=11 // pred_region
        _
      $region24: #{_forward_jit.1} parent=11 // pred_fallthru
        _
      // Predicated region
      $region25: #{_forward_jit.1} parent=11 // pred_check
        %p330 = pneg %p154
      $region26: #{_forward_jit.1} parent=11 // pred_check_branch
        %332 = sbr.rel (%p330) target = $region28
      $region27: #{_forward_jit.1} parent=11 // pred_region
        _
      $region28: #{_forward_jit.1} parent=11 // pred_fallthru
        _
      // Predicated region
      $region29: #{_forward_jit.1} parent=11 // pred_check
        %p333 = pneg %p175
      $region30: #{_forward_jit.1} parent=11 // pred_check_branch
        %335 = sbr.rel (%p333) target = $region32
      $region31: #{_forward_jit.1} parent=11 // pred_region
        _
      $region32: #{_forward_jit.1} parent=11 // pred_fallthru
        _
      // Predicated region
      $region33: #{_forward_jit.1} parent=11 // pred_check
        %p336 = pneg %p196
      $region34: #{_forward_jit.1} parent=11 // pred_check_branch
        %338 = sbr.rel (%p336) target = $region36
      $region35: #{_forward_jit.1} parent=11 // pred_region
        _
      $region36: #{_forward_jit.1} parent=11 // pred_fallthru
        _
      // Predicated region
      $region37: #{_forward_jit.1} parent=11 // pred_check
        %p339 = pneg %p217
      $region38: #{_forward_jit.1} parent=11 // pred_check_branch
        %341 = sbr.rel (%p339) target = $region40
      $region39: #{_forward_jit.1} parent=11 // pred_region
        _
      $region40: #{_forward_jit.1} parent=11 // pred_fallthru
        _
      // Predicated region
      $region41: #{_forward_jit.1} parent=11 // pred_check
        %p342 = pneg %p238
      $region42: #{_forward_jit.1} parent=11 // pred_check_branch
        %344 = sbr.rel (%p342) target = $region44
      $region43: #{_forward_jit.1} parent=11 // pred_region
        _
      $region44: #{_forward_jit.1} parent=11 // pred_fallthru
        _
      // Predicated region
      $region45: #{_forward_jit.1} parent=11 // pred_check
        %p345 = pneg %p259
      $region46: #{_forward_jit.1} parent=11 // pred_check_branch
        %347 = sbr.rel (%p345) target = $region48
      $region47: #{_forward_jit.1} parent=11 // pred_region
        _
      $region48: #{_forward_jit.1} parent=11 // pred_fallthru
        _
      // Predicated region
      $region49: #{_forward_jit.1} parent=11 // pred_check
        %p348 = pneg %p280
      $region50: #{_forward_jit.1} parent=11 // pred_check_branch
        %350 = sbr.rel (%p348) target = $region52
      $region51: #{_forward_jit.1} parent=11 // pred_region
        _
      $region52: #{_forward_jit.1} parent=11 // pred_fallthru
        _
    $region12: #{_forward_jit.1} parent=5 // pred_fallthru
      _
    %p351 = scmp.lt.s32.totalorder %s18, 2
    // Predicated region
    $region53: #{_forward_jit.1} parent=5 // pred_check
      %p352 = pneg %p351
    $region54: #{_forward_jit.1} parent=5 // pred_check_branch
      %354 = sbr.rel (%p352) target = $region56
    $region55: #{_forward_jit.1} parent=5 // pred_region
      // Predicated region
      $region57: #{_forward_jit.1} parent=55 // pred_check
        %p355 = pneg %p38
      $region58: #{_forward_jit.1} parent=55 // pred_check_branch
        %357 = sbr.rel (%p355) target = $region60
      $region59: #{_forward_jit.1} parent=55 // pred_region
        %p358 = scmp.lt.s32.totalorder %s18, 1
        %s359 = scalar_select %p358, %s18, 1
        %s360 = smul.addr %s359, 4
        %s361 = scalar_lea.vmem %s0, %s360
      $region60: #{_forward_jit.1} parent=55 // pred_fallthru
        _
      // Predicated region
      $region61: #{_forward_jit.1} parent=55 // pred_check
        %p362 = pneg %p64
      $region62: #{_forward_jit.1} parent=55 // pred_check_branch
        %364 = sbr.rel (%p362) target = $region64
      $region63: #{_forward_jit.1} parent=55 // pred_region
        %p365 = scmp.lt.s32.totalorder %s18, 1
        %s366 = scalar_select %p365, %s18, 1
        %s367 = smul.addr %s366, 4
        %s368 = scalar_lea.vmem %s1, %s367
      $region64: #{_forward_jit.1} parent=55 // pred_fallthru
        _
    $region56: #{_forward_jit.1} parent=5 // pred_fallthru
      _
    %p369 = scmp.le.s32.totalorder 1, %s18
    %p370 = scmp.lt.s32.totalorder %s18, 3
    %p371 = pnand %p369, %p370
    %p372 = pneg %p371
    // Predicated region
    $region65: #{_forward_jit.1} parent=5 // pred_check
      _
    $region66: #{_forward_jit.1} parent=5 // pred_check_branch
      %374 = sbr.rel (%p371) target = $region68
    $region67: #{_forward_jit.1} parent=5 // pred_region
      %s375 = ssub.s32 %s18, 1
      %p376 = scmp.lt.s32.totalorder %s23, 1
      %s377 = scalar_select %p376, %s23, 1
      %s378 = smul.addr %s377, 4
      %s379 = scalar_lea.vmem %s0, %s378
      %p380 = pneg %p44
      %p381 = pneg %p41
      %p382 = scmp.lt.s32.totalorder %s23, 1
      %s383 = scalar_select %p382, %s23, 1
      %s384 = smul.addr %s383, 4
      %s385 = scalar_lea.vmem %s1, %s384
      %p386 = pneg %p70
      %p387 = pneg %p67
      %p388 = pneg %p91
      %p389 = pneg %p88
      %p390 = pneg %p112
      %p391 = pneg %p109
      %p392 = pneg %p133
      %p393 = pneg %p130
      %p394 = pneg %p154
      %p395 = pneg %p151
      %p396 = pneg %p175
      %p397 = pneg %p172
      %p398 = pneg %p196
      %p399 = pneg %p193
      %p400 = pneg %p217
      %p401 = pneg %p214
      %p402 = pneg %p238
      %p403 = pneg %p235
      %p404 = pneg %p259
      %p405 = pneg %p256
      %p406 = pneg %p280
      %p407 = pneg %p277
      %p408 = pneg %p306
      %p409 = pneg %p303
      %p410 = scmp.lt.s32.totalorder %s23, 1
      %s411 = scalar_select %p410, %s23, 1
      %s412 = scalar_lea.vmem %s12, %s411
      %p413 = scmp.lt.s32.totalorder %s23, 1
      %s414 = scalar_select %p413, %s23, 1
      %s415 = smul.addr %s414, 4
      %s416 = scalar_lea.vmem %s0, %s415
      %p417 = scmp.lt.s32.totalorder %s23, 1
      %s418 = scalar_select %p417, %s23, 1
      %s419 = smul.addr %s418, 4
      %s420 = scalar_lea.vmem %s1, %s419
      %p421 = scmp.lt.s32.totalorder %s23, 1
      %s422 = scalar_select %p421, %s23, 1
      %s423 = scalar_lea.vmem %s12, %s422
      %v424 = vld [vmem:[%s416] sm:$0xf]
      %v425 = vlaneseq
      %v426 = vand.u32 %v425, 127
      %427 = vset.pattern.permute.xlu0 0
      %428 = vperm.xlu0 %427, %v424
      %v429 = vpop.permute.xlu0 %428
      %vm430 = vcmp.eq.s32.totalorder %v426, %v429
      %v431 = vsel %vm430, 1, 0
      %v432 = vcvt.s32.f32 %v431
      %v433 = vld [vmem:[%s2] sm:$0xff]
      %v434 = vld [vmem:[%s2 + $0x8] sm:$0x3]
      %vm435 = vcmask 80896
      %v437 = vsel %vm435, %v432, 0
      %vm439 = vcmask 1041408
      %v441 = vsel %vm439, %v434, 0
      %443 = vmatprep.subr.mxu0 0.0
      %444 = vmatpush1.msra.mxu0 %v433
      %445 = vmatprep.subr.mxu0 0.0
      %446 = vmatpush1.msra.mxu0 %v441
      %447 = vmatprep.subr.mxu0 0.0
      %448 = vmatpush1.msra.mxu0 0.0
      %449 = vmatprep.subr.mxu0 0.0
      %450 = vmatpush1.msra.mxu0 0.0
      %451 = vmatprep.subr.mxu0 0.0
      %452 = vmatpush1.msra.mxu0 0.0
      %453 = vmatprep.subr.mxu0 0.0
      %454 = vmatpush1.msra.mxu0 0.0
      %455 = vmatprep.subr.mxu0 0.0
      %456 = vmatpush1.msra.mxu0 0.0
      %457 = vmatprep.subr.mxu0 0.0
      %458 = vmatpush1.msra.mxu0 0.0
      %459 = vmatprep.subr.mxu0 0.0
      %460 = vmatpush1.msra.mxu0 0.0
      %461 = vmatprep.subr.mxu0 0.0
      %462 = vmatpush1.msra.mxu0 0.0
      %463 = vmatprep.subr.mxu0 0.0
      %464 = vmatpush1.msra.mxu0 0.0
      %465 = vmatprep.subr.mxu0 0.0
      %466 = vmatpush1.msra.mxu0 0.0
      %467 = vmatprep.subr.mxu0 0.0
      %468 = vmatpush1.msra.mxu0 0.0
      %469 = vmatprep.subr.mxu0 0.0
      %470 = vmatpush1.msra.mxu0 0.0
      %471 = vmatprep.subr.mxu0 0.0
      %472 = vmatpush1.msra.mxu0 0.0
      %473 = vmatprep.subr.mxu0 0.0
      %474 = vmatpush1.msra.mxu0 0.0
      %475 = vmatprep.subr.mxu0 0.0
      %476 = vmatpush1.msra.mxu0 0.0
      %477 = vmatprep.subr.mxu0 0.0
      %478 = vmatpush1.msra.mxu0 0.0
      %479 = vmatprep.subr.mxu0 0.0
      %480 = vmatpush1.msra.mxu0 0.0
      %481 = vmatprep.subr.mxu0 0.0
      %482 = vmatpush1.msra.mxu0 0.0
      %483 = vmatprep.subr.mxu0 0.0
      %484 = vmatpush1.msra.mxu0 0.0
      %485 = vmatprep.subr.mxu0 0.0
      %486 = vmatpush1.msra.mxu0 0.0
      %487 = vmatprep.subr.mxu0 0.0
      %488 = vmatpush1.msra.mxu0 0.0
      %489 = vmatprep.subr.mxu0 0.0
      %490 = vmatpush1.msra.mxu0 0.0
      %491 = vmatprep.subr.mxu0 0.0
      %492 = vmatpush1.msra.mxu0 0.0
      %493 = vmatprep.subr.mxu0 0.0
      %494 = vmatpush1.msra.mxu0 0.0
      %495 = vmatprep.subr.mxu0 0.0
      %496 = vmatpush1.msra.mxu0 0.0
      %497 = vmatprep.subr.mxu0 0.0
      %498 = vmatpush1.msra.mxu0 0.0
      %499 = vmatprep.subr.mxu0 0.0
      %500 = vmatpush1.msra.mxu0 0.0
      %501 = vmatprep.subr.mxu0 0.0
      %502 = vmatpush1.msra.mxu0 0.0
      %503 = vmatprep.subr.mxu0 0.0
      %504 = vmatpush1.msra.mxu0 0.0
      %505 = vmatprep.subr.mxu0 0.0
      %506 = vmatpush1.msra.mxu0 0.0
      %507 = vmatprep.mubr.f32.mxu0 0.0
      %508 = vmatmul.mubr.f32.gmra.mrb[0].mxu0 %v437
      %v509 = vpop.f32.mrb[0].mxu0
      %v510 = vadd.f32 0.0, %v509
      %v511 = vpop.f32.mrb[0].mxu0
      %512 = vdwg.mxu0
      %v513 = vld [vmem:[%s420] sm:$0xf]
      %vm514 = vcmp.ne.f32.partialorder %v513, %v513
      %v515 = vsel %vm514, 1.0, %v513
      %v516 = vld [vmem:[%s3] sm:$0xff]
      %v517 = vld [vmem:[%s3 + $0x8] sm:$0xff]
      %v518 = vld [vmem:[%s3 + $0x10] sm:$0xff]
      %v519 = vld [vmem:[%s3 + $0x18] sm:$0xff]
      %v520 = vld [vmem:[%s4] sm:$0xff]
      %v521 = vld [vmem:[%s4 + $0x8] sm:$0xff]
      %v522 = vld [vmem:[%s4 + $0x10] sm:$0xff]
      %v523 = vld [vmem:[%s4 + $0x18] sm:$0xff]
      %vm524 = vcmask 261120
      %v526 = vsel %vm524, %v515, 0
      %528 = vmatprep.subr.mxu0 0.0
      %529 = vmatpush1.msra.mxu0 %v520
      %530 = vmatprep.subr.mxu0 0.0
      %531 = vmatpush1.msra.mxu0 %v521
      %532 = vmatprep.subr.mxu0 0.0
      %533 = vmatpush1.msra.mxu0 %v522
      %534 = vmatprep.subr.mxu0 0.0
      %535 = vmatpush1.msra.mxu0 %v523
      %536 = vmatprep.subr.mxu0 0.0
      %537 = vmatpush1.msra.mxu0 0.0
      %538 = vmatprep.subr.mxu0 0.0
      %539 = vmatpush1.msra.mxu0 0.0
      %540 = vmatprep.subr.mxu0 0.0
      %541 = vmatpush1.msra.mxu0 0.0
      %542 = vmatprep.subr.mxu0 0.0
      %543 = vmatpush1.msra.mxu0 0.0
      %544 = vmatprep.subr.mxu0 0.0
      %545 = vmatpush1.msra.mxu0 0.0
      %546 = vmatprep.subr.mxu0 0.0
      %547 = vmatpush1.msra.mxu0 0.0
      %548 = vmatprep.subr.mxu0 0.0
      %549 = vmatpush1.msra.mxu0 0.0
      %550 = vmatprep.subr.mxu0 0.0
      %551 = vmatpush1.msra.mxu0 0.0
      %552 = vmatprep.subr.mxu0 0.0
      %553 = vmatpush1.msra.mxu0 0.0
      %554 = vmatprep.subr.mxu0 0.0
      %555 = vmatpush1.msra.mxu0 0.0
      %556 = vmatprep.subr.mxu0 0.0
      %557 = vmatpush1.msra.mxu0 0.0
      %558 = vmatprep.subr.mxu0 0.0
      %559 = vmatpush1.msra.mxu0 0.0
      %560 = vmatprep.subr.mxu0 0.0
      %561 = vmatpush1.msra.mxu0 0.0
      %562 = vmatprep.subr.mxu0 0.0
      %563 = vmatpush1.msra.mxu0 0.0
      %564 = vmatprep.subr.mxu0 0.0
      %565 = vmatpush1.msra.mxu0 0.0
      %566 = vmatprep.subr.mxu0 0.0
      %567 = vmatpush1.msra.mxu0 0.0
      %568 = vmatprep.subr.mxu0 0.0
      %569 = vmatpush1.msra.mxu0 0.0
      %570 = vmatprep.subr.mxu0 0.0
      %571 = vmatpush1.msra.mxu0 0.0
      %572 = vmatprep.subr.mxu0 0.0
      %573 = vmatpush1.msra.mxu0 0.0
      %574 = vmatprep.subr.mxu0 0.0
      %575 = vmatpush1.msra.mxu0 0.0
      %576 = vmatprep.subr.mxu0 0.0
      %577 = vmatpush1.msra.mxu0 0.0
      %578 = vmatprep.subr.mxu0 0.0
      %579 = vmatpush1.msra.mxu0 0.0
      %580 = vmatprep.subr.mxu0 0.0
      %581 = vmatpush1.msra.mxu0 0.0
      %582 = vmatprep.subr.mxu0 0.0
      %583 = vmatpush1.msra.mxu0 0.0
      %584 = vmatprep.subr.mxu0 0.0
      %585 = vmatpush1.msra.mxu0 0.0
      %586 = vmatprep.subr.mxu0 0.0
      %587 = vmatpush1.msra.mxu0 0.0
      %588 = vmatprep.subr.mxu0 0.0
      %589 = vmatpush1.msra.mxu0 0.0
      %590 = vmatprep.subr.mxu0 0.0
      %591 = vmatpush1.msra.mxu0 0.0
      %592 = vmatprep.mubr.f32.mxu0 0.0
      %593 = vmatmul.mubr.f32.gmra.mrb[0].mxu0 %v526
      %v594 = vpop.f32.mrb[0].mxu0
      %v595 = vadd.f32 0.0, %v594
      %v596 = vpop.f32.mrb[0].mxu0
      %597 = vdwg.mxu0
      %v599 = vsel %vm524, %v510, 0
      %601 = vmatprep.subr.mxu0 0.0
      %602 = vmatpush1.msra.mxu0 %v516
      %603 = vmatprep.subr.mxu0 0.0
      %604 = vmatpush1.msra.mxu0 %v517
      %605 = vmatprep.subr.mxu0 0.0
      %606 = vmatpush1.msra.mxu0 %v518
      %607 = vmatprep.subr.mxu0 0.0
      %608 = vmatpush1.msra.mxu0 %v519
      %609 = vmatprep.subr.mxu0 0.0
      %610 = vmatpush1.msra.mxu0 0.0
      %611 = vmatprep.subr.mxu0 0.0
      %612 = vmatpush1.msra.mxu0 0.0
      %613 = vmatprep.subr.mxu0 0.0
      %614 = vmatpush1.msra.mxu0 0.0
      %615 = vmatprep.subr.mxu0 0.0
      %616 = vmatpush1.msra.mxu0 0.0
      %617 = vmatprep.subr.mxu0 0.0
      %618 = vmatpush1.msra.mxu0 0.0
      %619 = vmatprep.subr.mxu0 0.0
      %620 = vmatpush1.msra.mxu0 0.0
      %621 = vmatprep.subr.mxu0 0.0
      %622 = vmatpush1.msra.mxu0 0.0
      %623 = vmatprep.subr.mxu0 0.0
      %624 = vmatpush1.msra.mxu0 0.0
      %625 = vmatprep.subr.mxu0 0.0
      %626 = vmatpush1.msra.mxu0 0.0
      %627 = vmatprep.subr.mxu0 0.0
      %628 = vmatpush1.msra.mxu0 0.0
      %629 = vmatprep.subr.mxu0 0.0
      %630 = vmatpush1.msra.mxu0 0.0
      %631 = vmatprep.subr.mxu0 0.0
      %632 = vmatpush1.msra.mxu0 0.0
      %633 = vmatprep.subr.mxu0 0.0
      %634 = vmatpush1.msra.mxu0 0.0
      %635 = vmatprep.subr.mxu0 0.0
      %636 = vmatpush1.msra.mxu0 0.0
      %637 = vmatprep.subr.mxu0 0.0
      %638 = vmatpush1.msra.mxu0 0.0
      %639 = vmatprep.subr.mxu0 0.0
      %640 = vmatpush1.msra.mxu0 0.0
      %641 = vmatprep.subr.mxu0 0.0
      %642 = vmatpush1.msra.mxu0 0.0
      %643 = vmatprep.subr.mxu0 0.0
      %644 = vmatpush1.msra.mxu0 0.0
      %645 = vmatprep.subr.mxu0 0.0
      %646 = vmatpush1.msra.mxu0 0.0
      %647 = vmatprep.subr.mxu0 0.0
      %648 = vmatpush1.msra.mxu0 0.0
      %649 = vmatprep.subr.mxu0 0.0
      %650 = vmatpush1.msra.mxu0 0.0
      %651 = vmatprep.subr.mxu0 0.0
      %652 = vmatpush1.msra.mxu0 0.0
      %653 = vmatprep.subr.mxu0 0.0
      %654 = vmatpush1.msra.mxu0 0.0
      %655 = vmatprep.subr.mxu0 0.0
      %656 = vmatpush1.msra.mxu0 0.0
      %657 = vmatprep.subr.mxu0 0.0
      %658 = vmatpush1.msra.mxu0 0.0
      %659 = vmatprep.subr.mxu0 0.0
      %660 = vmatpush1.msra.mxu0 0.0
      %661 = vmatprep.subr.mxu0 0.0
      %662 = vmatpush1.msra.mxu0 0.0
      %663 = vmatprep.subr.mxu0 0.0
      %664 = vmatpush1.msra.mxu0 0.0
      %665 = vmatprep.mubr.f32.mxu0 0.0
      %666 = vmatmul.mubr.f32.gmra.mrb[0].mxu0 %v599
      %v667 = vpop.f32.mrb[0].mxu0
      %v668 = vadd.f32 %v595, %v667
      %v669 = vpop.f32.mrb[0].mxu0
      %670 = vdwg.mxu0
      %v671 = vld [vmem:[%s5] sm:$0x1]
      %v673 = vlaneseq
      %v674 = vshrl.u32 %v673, 7
      %v675 = vsub.s32 0, %v674
      %v676 = vrot.slane %v671, %v675
      %v678 = vadd.f32 %v668, %v676
      %v679 = vld [vmem:[%s6] sm:$0xff]
      %v680 = vld [vmem:[%s6 + $0x8] sm:$0xff]
      %v681 = vld [vmem:[%s6 + $0x10] sm:$0xff]
      %v682 = vld [vmem:[%s6 + $0x18] sm:$0xff]
      %v683 = vld [vmem:[%s7] sm:$0xff]
      %v684 = vld [vmem:[%s7 + $0x8] sm:$0xff]
      %v685 = vld [vmem:[%s7 + $0x10] sm:$0xff]
      %v686 = vld [vmem:[%s7 + $0x18] sm:$0xff]
      %v687 = vld [vmem:[%s8] sm:$0x1]
      %v689 = vlaneseq
      %v690 = vshrl.u32 %v689, 7
      %v691 = vsub.s32 0, %v690
      %v692 = vrot.slane %v687, %v691
      %v695 = vsel %vm524, %v678, 0
      %697 = vmatprep.subr.mxu0 0.0
      %698 = vmatpush1.msra.mxu0 %v679
      %699 = vmatprep.subr.mxu0 0.0
      %700 = vmatpush1.msra.mxu0 %v680
      %701 = vmatprep.subr.mxu0 0.0
      %702 = vmatpush1.msra.mxu0 %v681
      %703 = vmatprep.subr.mxu0 0.0
      %704 = vmatpush1.msra.mxu0 %v682
      %705 = vmatprep.subr.mxu0 0.0
      %706 = vmatpush1.msra.mxu0 0.0
      %707 = vmatprep.subr.mxu0 0.0
      %708 = vmatpush1.msra.mxu0 0.0
      %709 = vmatprep.subr.mxu0 0.0
      %710 = vmatpush1.msra.mxu0 0.0
      %711 = vmatprep.subr.mxu0 0.0
      %712 = vmatpush1.msra.mxu0 0.0
      %713 = vmatprep.subr.mxu0 0.0
      %714 = vmatpush1.msra.mxu0 0.0
      %715 = vmatprep.subr.mxu0 0.0
      %716 = vmatpush1.msra.mxu0 0.0
      %717 = vmatprep.subr.mxu0 0.0
      %718 = vmatpush1.msra.mxu0 0.0
      %719 = vmatprep.subr.mxu0 0.0
      %720 = vmatpush1.msra.mxu0 0.0
      %721 = vmatprep.subr.mxu0 0.0
      %722 = vmatpush1.msra.mxu0 0.0
      %723 = vmatprep.subr.mxu0 0.0
      %724 = vmatpush1.msra.mxu0 0.0
      %725 = vmatprep.subr.mxu0 0.0
      %726 = vmatpush1.msra.mxu0 0.0
      %727 = vmatprep.subr.mxu0 0.0
      %728 = vmatpush1.msra.mxu0 0.0
      %729 = vmatprep.subr.mxu0 0.0
      %730 = vmatpush1.msra.mxu0 0.0
      %731 = vmatprep.subr.mxu0 0.0
      %732 = vmatpush1.msra.mxu0 0.0
      %733 = vmatprep.subr.mxu0 0.0
      %734 = vmatpush1.msra.mxu0 0.0
      %735 = vmatprep.subr.mxu0 0.0
      %736 = vmatpush1.msra.mxu0 0.0
      %737 = vmatprep.subr.mxu0 0.0
      %738 = vmatpush1.msra.mxu0 0.0
      %739 = vmatprep.subr.mxu0 0.0
      %740 = vmatpush1.msra.mxu0 0.0
      %741 = vmatprep.subr.mxu0 0.0
      %742 = vmatpush1.msra.mxu0 0.0
      %743 = vmatprep.subr.mxu0 0.0
      %744 = vmatpush1.msra.mxu0 0.0
      %745 = vmatprep.subr.mxu0 0.0
      %746 = vmatpush1.msra.mxu0 0.0
      %747 = vmatprep.subr.mxu0 0.0
      %748 = vmatpush1.msra.mxu0 0.0
      %749 = vmatprep.subr.mxu0 0.0
      %750 = vmatpush1.msra.mxu0 0.0
      %751 = vmatprep.subr.mxu0 0.0
      %752 = vmatpush1.msra.mxu0 0.0
      %753 = vmatprep.subr.mxu0 0.0
      %754 = vmatpush1.msra.mxu0 0.0
      %755 = vmatprep.subr.mxu0 0.0
      %756 = vmatpush1.msra.mxu0 0.0
      %757 = vmatprep.subr.mxu0 0.0
      %758 = vmatpush1.msra.mxu0 0.0
      %759 = vmatprep.subr.mxu0 0.0
      %760 = vmatpush1.msra.mxu0 0.0
      %761 = vmatprep.mubr.f32.mxu0 0.0
      %762 = vmatmul.mubr.f32.gmra.mrb[0].mxu0 %v695
      %v763 = vpop.f32.mrb[0].mxu0
      %v764 = vadd.f32 %v692, %v763
      %v765 = vpop.f32.mrb[0].mxu0
      %766 = vdwg.mxu0
      %v768 = vsel %vm524, 0.0, 0
      %770 = vmatprep.subr.mxu0 0.0
      %771 = vmatpush1.msra.mxu0 %v683
      %772 = vmatprep.subr.mxu0 0.0
      %773 = vmatpush1.msra.mxu0 %v684
      %774 = vmatprep.subr.mxu0 0.0
      %775 = vmatpush1.msra.mxu0 %v685
      %776 = vmatprep.subr.mxu0 0.0
      %777 = vmatpush1.msra.mxu0 %v686
      %778 = vmatprep.subr.mxu0 0.0
      %779 = vmatpush1.msra.mxu0 0.0
      %780 = vmatprep.subr.mxu0 0.0
      %781 = vmatpush1.msra.mxu0 0.0
      %782 = vmatprep.subr.mxu0 0.0
      %783 = vmatpush1.msra.mxu0 0.0
      %784 = vmatprep.subr.mxu0 0.0
      %785 = vmatpush1.msra.mxu0 0.0
      %786 = vmatprep.subr.mxu0 0.0
      %787 = vmatpush1.msra.mxu0 0.0
      %788 = vmatprep.subr.mxu0 0.0
      %789 = vmatpush1.msra.mxu0 0.0
      %790 = vmatprep.subr.mxu0 0.0
      %791 = vmatpush1.msra.mxu0 0.0
      %792 = vmatprep.subr.mxu0 0.0
      %793 = vmatpush1.msra.mxu0 0.0
      %794 = vmatprep.subr.mxu0 0.0
      %795 = vmatpush1.msra.mxu0 0.0
      %796 = vmatprep.subr.mxu0 0.0
      %797 = vmatpush1.msra.mxu0 0.0
      %798 = vmatprep.subr.mxu0 0.0
      %799 = vmatpush1.msra.mxu0 0.0
      %800 = vmatprep.subr.mxu0 0.0
      %801 = vmatpush1.msra.mxu0 0.0
      %802 = vmatprep.subr.mxu0 0.0
      %803 = vmatpush1.msra.mxu0 0.0
      %804 = vmatprep.subr.mxu0 0.0
      %805 = vmatpush1.msra.mxu0 0.0
      %806 = vmatprep.subr.mxu0 0.0
      %807 = vmatpush1.msra.mxu0 0.0
      %808 = vmatprep.subr.mxu0 0.0
      %809 = vmatpush1.msra.mxu0 0.0
      %810 = vmatprep.subr.mxu0 0.0
      %811 = vmatpush1.msra.mxu0 0.0
      %812 = vmatprep.subr.mxu0 0.0
      %813 = vmatpush1.msra.mxu0 0.0
      %814 = vmatprep.subr.mxu0 0.0
      %815 = vmatpush1.msra.mxu0 0.0
      %816 = vmatprep.subr.mxu0 0.0
      %817 = vmatpush1.msra.mxu0 0.0
      %818 = vmatprep.subr.mxu0 0.0
      %819 = vmatpush1.msra.mxu0 0.0
      %820 = vmatprep.subr.mxu0 0.0
      %821 = vmatpush1.msra.mxu0 0.0
      %822 = vmatprep.subr.mxu0 0.0
      %823 = vmatpush1.msra.mxu0 0.0
      %824 = vmatprep.subr.mxu0 0.0
      %825 = vmatpush1.msra.mxu0 0.0
      %826 = vmatprep.subr.mxu0 0.0
      %827 = vmatpush1.msra.mxu0 0.0
      %828 = vmatprep.subr.mxu0 0.0
      %829 = vmatpush1.msra.mxu0 0.0
      %830 = vmatprep.subr.mxu0 0.0
      %831 = vmatpush1.msra.mxu0 0.0
      %832 = vmatprep.subr.mxu0 0.0
      %833 = vmatpush1.msra.mxu0 0.0
      %834 = vmatprep.mubr.f32.mxu0 0.0
      %835 = vmatmul.mubr.f32.gmra.mrb[0].mxu0 %v768
      %v836 = vpop.f32.mrb[0].mxu0
      %v837 = vadd.f32 0.0, %v836
      %v838 = vpop.f32.mrb[0].mxu0
      %839 = vdwg.mxu0
      %v840 = vadd.f32 %v764, %v837
      %v841 = vxor.u32 %v840, 2147483648
      %v842 = vmul.f32 %v841, 1.442695
      %v843 = vpow.pop %v842
      %v844 = vadd.f32 %v843, 1.0
      %v845 = vrcp.pop %v844
      %v846 = vmul.f32 1.0, %v845
      %v847 = vtanh.pop %v840
      %v848 = vmul.f32 %v846, 0.0
      %850 = vrot.lane.b32.xlu0 %v847, 64
      %v851 = vpop.permute.xlu0 %850
      %v853 = vmul.f32 %v846, %v851
      %855 = vrot.lane.b32.xlu0 %v853, 32
      %v856 = vpop.permute.xlu0 %855
      %v858 = vadd.f32 %v848, %v856
      %v859 = vtanh.pop %v858
      %861 = vrot.lane.b32.xlu0 %v859, 64
      %v862 = vpop.permute.xlu0 %861
      %v864 = vmul.f32 %v846, %v862
      %866 = vrot.lane.b32.xlu0 %v864, 32
      %v867 = vpop.permute.xlu0 %866
      %v868 = vsel %vm524, %v867, 0
      %870 = vmatprep.subr.mxu0 0.0
      %871 = vmatpush1.msra.mxu0 %v683
      %872 = vmatprep.subr.mxu0 0.0
      %873 = vmatpush1.msra.mxu0 %v684
      %874 = vmatprep.subr.mxu0 0.0
      %875 = vmatpush1.msra.mxu0 %v685
      %876 = vmatprep.subr.mxu0 0.0
      %877 = vmatpush1.msra.mxu0 %v686
      %878 = vmatprep.subr.mxu0 0.0
      %879 = vmatpush1.msra.mxu0 0.0
      %880 = vmatprep.subr.mxu0 0.0
      %881 = vmatpush1.msra.mxu0 0.0
      %882 = vmatprep.subr.mxu0 0.0
      %883 = vmatpush1.msra.mxu0 0.0
      %884 = vmatprep.subr.mxu0 0.0
      %885 = vmatpush1.msra.mxu0 0.0
      %886 = vmatprep.subr.mxu0 0.0
      %887 = vmatpush1.msra.mxu0 0.0
      %888 = vmatprep.subr.mxu0 0.0
      %889 = vmatpush1.msra.mxu0 0.0
      %890 = vmatprep.subr.mxu0 0.0
      %891 = vmatpush1.msra.mxu0 0.0
      %892 = vmatprep.subr.mxu0 0.0
      %893 = vmatpush1.msra.mxu0 0.0
      %894 = vmatprep.subr.mxu0 0.0
      %895 = vmatpush1.msra.mxu0 0.0
      %896 = vmatprep.subr.mxu0 0.0
      %897 = vmatpush1.msra.mxu0 0.0
      %898 = vmatprep.subr.mxu0 0.0
      %899 = vmatpush1.msra.mxu0 0.0
      %900 = vmatprep.subr.mxu0 0.0
      %901 = vmatpush1.msra.mxu0 0.0
      %902 = vmatprep.subr.mxu0 0.0
      %903 = vmatpush1.msra.mxu0 0.0
      %904 = vmatprep.subr.mxu0 0.0
      %905 = vmatpush1.msra.mxu0 0.0
      %906 = vmatprep.subr.mxu0 0.0
      %907 = vmatpush1.msra.mxu0 0.0
      %908 = vmatprep.subr.mxu0 0.0
      %909 = vmatpush1.msra.mxu0 0.0
      %910 = vmatprep.subr.mxu0 0.0
      %911 = vmatpush1.msra.mxu0 0.0
      %912 = vmatprep.subr.mxu0 0.0
      %913 = vmatpush1.msra.mxu0 0.0
      %914 = vmatprep.subr.mxu0 0.0
      %915 = vmatpush1.msra.mxu0 0.0
      %916 = vmatprep.subr.mxu0 0.0
      %917 = vmatpush1.msra.mxu0 0.0
      %918 = vmatprep.subr.mxu0 0.0
      %919 = vmatpush1.msra.mxu0 0.0
      %920 = vmatprep.subr.mxu0 0.0
      %921 = vmatpush1.msra.mxu0 0.0
      %922 = vmatprep.subr.mxu0 0.0
      %923 = vmatpush1.msra.mxu0 0.0
      %924 = vmatprep.subr.mxu0 0.0
      %925 = vmatpush1.msra.mxu0 0.0
      %926 = vmatprep.subr.mxu0 0.0
      %927 = vmatpush1.msra.mxu0 0.0
      %928 = vmatprep.subr.mxu0 0.0
      %929 = vmatpush1.msra.mxu0 0.0
      %930 = vmatprep.subr.mxu0 0.0
      %931 = vmatpush1.msra.mxu0 0.0
      %932 = vmatprep.subr.mxu0 0.0
      %933 = vmatpush1.msra.mxu0 0.0
      %934 = vmatprep.mubr.f32.mxu0 0.0
      %935 = vmatmul.mubr.f32.gmra.mrb[0].mxu0 %v868
      %v936 = vpop.f32.mrb[0].mxu0
      %v937 = vadd.f32 0.0, %v936
      %v938 = vpop.f32.mrb[0].mxu0
      %939 = vdwg.mxu0
      %v941 = vrot.slane %v937, 7
      %v943 = vadd.f32 %v764, %v941
      %v944 = vxor.u32 %v943, 2147483648
      %v945 = vmul.f32 %v944, 1.442695
      %v946 = vpow.pop %v945
      %v947 = vadd.f32 %v946, 1.0
      %v948 = vrcp.pop %v947
      %v949 = vmul.f32 1.0, %v948
      %v950 = vtanh.pop %v943
      %v952 = vrot.slane %v858, 7
      %v954 = vmul.f32 %v949, %v952
      %956 = vrot.lane.b32.xlu0 %v950, 64
      %v957 = vpop.permute.xlu0 %956
      %v959 = vmul.f32 %v949, %v957
      %961 = vrot.lane.b32.xlu0 %v959, 32
      %v962 = vpop.permute.xlu0 %961
      %v964 = vadd.f32 %v954, %v962
      %v965 = vtanh.pop %v964
      %967 = vrot.lane.b32.xlu0 %v965, 64
      %v968 = vpop.permute.xlu0 %967
      %v970 = vmul.f32 %v949, %v968
      %v972 = vrot.slane %v970, 1
      %973 = vrot.lane.b32.xlu0 %v972, 32
      %v974 = vpop.permute.xlu0 %973
      %v975 = vsel %vm524, %v974, 0
      %977 = vmatprep.subr.mxu0 0.0
      %978 = vmatpush1.msra.mxu0 %v683
      %979 = vmatprep.subr.mxu0 0.0
      %980 = vmatpush1.msra.mxu0 %v684
      %981 = vmatprep.subr.mxu0 0.0
      %982 = vmatpush1.msra.mxu0 %v685
      %983 = vmatprep.subr.mxu0 0.0
      %984 = vmatpush1.msra.mxu0 %v686
      %985 = vmatprep.subr.mxu0 0.0
      %986 = vmatpush1.msra.mxu0 0.0
      %987 = vmatprep.subr.mxu0 0.0
      %988 = vmatpush1.msra.mxu0 0.0
      %989 = vmatprep.subr.mxu0 0.0
      %990 = vmatpush1.msra.mxu0 0.0
      %991 = vmatprep.subr.mxu0 0.0
      %992 = vmatpush1.msra.mxu0 0.0
      %993 = vmatprep.subr.mxu0 0.0
      %994 = vmatpush1.msra.mxu0 0.0
      %995 = vmatprep.subr.mxu0 0.0
      %996 = vmatpush1.msra.mxu0 0.0
      %997 = vmatprep.subr.mxu0 0.0
      %998 = vmatpush1.msra.mxu0 0.0
      %999 = vmatprep.subr.mxu0 0.0
      %1000 = vmatpush1.msra.mxu0 0.0
      %1001 = vmatprep.subr.mxu0 0.0
      %1002 = vmatpush1.msra.mxu0 0.0
      %1003 = vmatprep.subr.mxu0 0.0
      %1004 = vmatpush1.msra.mxu0 0.0
      %1005 = vmatprep.subr.mxu0 0.0
      %1006 = vmatpush1.msra.mxu0 0.0
      %1007 = vmatprep.subr.mxu0 0.0
      %1008 = vmatpush1.msra.mxu0 0.0
      %1009 = vmatprep.subr.mxu0 0.0
      %1010 = vmatpush1.msra.mxu0 0.0
      %1011 = vmatprep.subr.mxu0 0.0
      %1012 = vmatpush1.msra.mxu0 0.0
      %1013 = vmatprep.subr.mxu0 0.0
      %1014 = vmatpush1.msra.mxu0 0.0
      %1015 = vmatprep.subr.mxu0 0.0
      %1016 = vmatpush1.msra.mxu0 0.0
      %1017 = vmatprep.subr.mxu0 0.0
      %1018 = vmatpush1.msra.mxu0 0.0
      %1019 = vmatprep.subr.mxu0 0.0
      %1020 = vmatpush1.msra.mxu0 0.0
      %1021 = vmatprep.subr.mxu0 0.0
      %1022 = vmatpush1.msra.mxu0 0.0
      %1023 = vmatprep.subr.mxu0 0.0
      %1024 = vmatpush1.msra.mxu0 0.0
      %1025 = vmatprep.subr.mxu0 0.0
      %1026 = vmatpush1.msra.mxu0 0.0
      %1027 = vmatprep.subr.mxu0 0.0
      %1028 = vmatpush1.msra.mxu0 0.0
      %1029 = vmatprep.subr.mxu0 0.0
      %1030 = vmatpush1.msra.mxu0 0.0
      %1031 = vmatprep.subr.mxu0 0.0
      %1032 = vmatpush1.msra.mxu0 0.0
      %1033 = vmatprep.subr.mxu0 0.0
      %1034 = vmatpush1.msra.mxu0 0.0
      %1035 = vmatprep.subr.mxu0 0.0
      %1036 = vmatpush1.msra.mxu0 0.0
      %1037 = vmatprep.subr.mxu0 0.0
      %1038 = vmatpush1.msra.mxu0 0.0
      %1039 = vmatprep.subr.mxu0 0.0
      %1040 = vmatpush1.msra.mxu0 0.0
      %1041 = vmatprep.mubr.f32.mxu0 0.0
      %1042 = vmatmul.mubr.f32.gmra.mrb[0].mxu0 %v975
      %v1043 = vpop.f32.mrb[0].mxu0
      %v1044 = vadd.f32 0.0, %v1043
      %v1045 = vpop.f32.mrb[0].mxu0
      %1046 = vdwg.mxu0
      %v1048 = vrot.slane %v1044, 6
      %v1050 = vadd.f32 %v764, %v1048
      %v1051 = vxor.u32 %v1050, 2147483648
      %v1052 = vmul.f32 %v1051, 1.442695
      %v1053 = vpow.pop %v1052
      %v1054 = vadd.f32 %v1053, 1.0
      %v1055 = vrcp.pop %v1054
      %v1056 = vmul.f32 1.0, %v1055
      %v1057 = vtanh.pop %v1050
      %v1059 = vrot.slane %v964, 7
      %v1061 = vmul.f32 %v1056, %v1059
      %1063 = vrot.lane.b32.xlu0 %v1057, 64
      %v1064 = vpop.permute.xlu0 %1063
      %v1066 = vmul.f32 %v1056, %v1064
      %1068 = vrot.lane.b32.xlu0 %v1066, 32
      %v1069 = vpop.permute.xlu0 %1068
      %v1071 = vadd.f32 %v1061, %v1069
      %v1072 = vtanh.pop %v1071
      %1074 = vrot.lane.b32.xlu0 %v1072, 64
      %v1075 = vpop.permute.xlu0 %1074
      %v1077 = vmul.f32 %v1056, %v1075
      %v1079 = vrot.slane %v1077, 2
      %1080 = vrot.lane.b32.xlu0 %v1079, 32
      %v1081 = vpop.permute.xlu0 %1080
      %v1082 = vsel %vm524, %v1081, 0
      %1084 = vmatprep.subr.mxu0 0.0
      %1085 = vmatpush1.msra.mxu0 %v683
      %1086 = vmatprep.subr.mxu0 0.0
      %1087 = vmatpush1.msra.mxu0 %v684
      %1088 = vmatprep.subr.mxu0 0.0
      %1089 = vmatpush1.msra.mxu0 %v685
      %1090 = vmatprep.subr.mxu0 0.0
      %1091 = vmatpush1.msra.mxu0 %v686
      %1092 = vmatprep.subr.mxu0 0.0
      %1093 = vmatpush1.msra.mxu0 0.0
      %1094 = vmatprep.subr.mxu0 0.0
      %1095 = vmatpush1.msra.mxu0 0.0
      %1096 = vmatprep.subr.mxu0 0.0
      %1097 = vmatpush1.msra.mxu0 0.0
      %1098 = vmatprep.subr.mxu0 0.0
      %1099 = vmatpush1.msra.mxu0 0.0
      %1100 = vmatprep.subr.mxu0 0.0
      %1101 = vmatpush1.msra.mxu0 0.0
      %1102 = vmatprep.subr.mxu0 0.0
      %1103 = vmatpush1.msra.mxu0 0.0
      %1104 = vmatprep.subr.mxu0 0.0
      %1105 = vmatpush1.msra.mxu0 0.0
      %1106 = vmatprep.subr.mxu0 0.0
      %1107 = vmatpush1.msra.mxu0 0.0
      %1108 = vmatprep.subr.mxu0 0.0
      %1109 = vmatpush1.msra.mxu0 0.0
      %1110 = vmatprep.subr.mxu0 0.0
      %1111 = vmatpush1.msra.mxu0 0.0
      %1112 = vmatprep.subr.mxu0 0.0
      %1113 = vmatpush1.msra.mxu0 0.0
      %1114 = vmatprep.subr.mxu0 0.0
      %1115 = vmatpush1.msra.mxu0 0.0
      %1116 = vmatprep.subr.mxu0 0.0
      %1117 = vmatpush1.msra.mxu0 0.0
      %1118 = vmatprep.subr.mxu0 0.0
      %1119 = vmatpush1.msra.mxu0 0.0
      %1120 = vmatprep.subr.mxu0 0.0
      %1121 = vmatpush1.msra.mxu0 0.0
      %1122 = vmatprep.subr.mxu0 0.0
      %1123 = vmatpush1.msra.mxu0 0.0
      %1124 = vmatprep.subr.mxu0 0.0
      %1125 = vmatpush1.msra.mxu0 0.0
      %1126 = vmatprep.subr.mxu0 0.0
      %1127 = vmatpush1.msra.mxu0 0.0
      %1128 = vmatprep.subr.mxu0 0.0
      %1129 = vmatpush1.msra.mxu0 0.0
      %1130 = vmatprep.subr.mxu0 0.0
      %1131 = vmatpush1.msra.mxu0 0.0
      %1132 = vmatprep.subr.mxu0 0.0
      %1133 = vmatpush1.msra.mxu0 0.0
      %1134 = vmatprep.subr.mxu0 0.0
      %1135 = vmatpush1.msra.mxu0 0.0
      %1136 = vmatprep.subr.mxu0 0.0
      %1137 = vmatpush1.msra.mxu0 0.0
      %1138 = vmatprep.subr.mxu0 0.0
      %1139 = vmatpush1.msra.mxu0 0.0
      %1140 = vmatprep.subr.mxu0 0.0
      %1141 = vmatpush1.msra.mxu0 0.0
      %1142 = vmatprep.subr.mxu0 0.0
      %1143 = vmatpush1.msra.mxu0 0.0
      %1144 = vmatprep.subr.mxu0 0.0
      %1145 = vmatpush1.msra.mxu0 0.0
      %1146 = vmatprep.subr.mxu0 0.0
      %1147 = vmatpush1.msra.mxu0 0.0
      %1148 = vmatprep.mubr.f32.mxu0 0.0
      %1149 = vmatmul.mubr.f32.gmra.mrb[0].mxu0 %v1082
      %v1150 = vpop.f32.mrb[0].mxu0
      %v1151 = vadd.f32 0.0, %v1150
      %v1152 = vpop.f32.mrb[0].mxu0
      %1153 = vdwg.mxu0
      %v1155 = vrot.slane %v1151, 5
      %v1157 = vadd.f32 %v764, %v1155
      %v1158 = vxor.u32 %v1157, 2147483648
      %v1159 = vmul.f32 %v1158, 1.442695
      %v1160 = vpow.pop %v1159
      %v1161 = vadd.f32 %v1160, 1.0
      %v1162 = vrcp.pop %v1161
      %v1163 = vmul.f32 1.0, %v1162
      %v1164 = vtanh.pop %v1157
      %v1166 = vrot.slane %v1071, 7
      %v1168 = vmul.f32 %v1163, %v1166
      %1170 = vrot.lane.b32.xlu0 %v1164, 64
      %v1171 = vpop.permute.xlu0 %1170
      %v1173 = vmul.f32 %v1163, %v1171
      %1175 = vrot.lane.b32.xlu0 %v1173, 32
      %v1176 = vpop.permute.xlu0 %1175
      %v1178 = vadd.f32 %v1168, %v1176
      %v1179 = vtanh.pop %v1178
      %1181 = vrot.lane.b32.xlu0 %v1179, 64
      %v1182 = vpop.permute.xlu0 %1181
      %v1184 = vmul.f32 %v1163, %v1182
      %vm1185 = vcmask 1040384
      %v1186 = vsel %vm1185, %v864, %v970
      %v1187 = vsel %vm439, %v1186, %v1077
      %vm1188 = vcmask 1042432
      %v1189 = vsel %vm1188, %v1187, %v1184
      %v1190 = vld [vmem:[%s9] sm:$0xff]
      %v1191 = vld [vmem:[%s9 + $0x8] sm:$0xff]
      %v1192 = vld [vmem:[%s9 + $0x10] sm:$0xff]
      %v1193 = vld [vmem:[%s9 + $0x18] sm:$0xff]
      %v1194 = vld [vmem:[%s10] sm:$0xff]
      %v1195 = vld [vmem:[%s10 + $0x8] sm:$0xff]
      %v1196 = vld [vmem:[%s10 + $0x10] sm:$0xff]
      %v1197 = vld [vmem:[%s10 + $0x18] sm:$0xff]
      %v1198 = vld [vmem:[%s11] sm:$0x1]
      %v1200 = vlaneseq
      %v1201 = vshrl.u32 %v1200, 7
      %v1202 = vsub.s32 0, %v1201
      %v1203 = vrot.slane %v1198, %v1202
      %1206 = vrot.lane.b32.xlu0 %v1189, 32
      %v1207 = vpop.permute.xlu0 %1206
      %v1208 = vsel %vm524, %v1207, 0
      %1210 = vmatprep.subr.mxu0 0.0
      %1211 = vmatpush1.msra.mxu0 %v1190
      %1212 = vmatprep.subr.mxu0 0.0
      %1213 = vmatpush1.msra.mxu0 %v1191
      %1214 = vmatprep.subr.mxu0 0.0
      %1215 = vmatpush1.msra.mxu0 %v1192
      %1216 = vmatprep.subr.mxu0 0.0
      %1217 = vmatpush1.msra.mxu0 %v1193
      %1218 = vmatprep.subr.mxu0 0.0
      %1219 = vmatpush1.msra.mxu0 0.0
      %1220 = vmatprep.subr.mxu0 0.0
      %1221 = vmatpush1.msra.mxu0 0.0
      %1222 = vmatprep.subr.mxu0 0.0
      %1223 = vmatpush1.msra.mxu0 0.0
      %1224 = vmatprep.subr.mxu0 0.0
      %1225 = vmatpush1.msra.mxu0 0.0
      %1226 = vmatprep.subr.mxu0 0.0
      %1227 = vmatpush1.msra.mxu0 0.0
      %1228 = vmatprep.subr.mxu0 0.0
      %1229 = vmatpush1.msra.mxu0 0.0
      %1230 = vmatprep.subr.mxu0 0.0
      %1231 = vmatpush1.msra.mxu0 0.0
      %1232 = vmatprep.subr.mxu0 0.0
      %1233 = vmatpush1.msra.mxu0 0.0
      %1234 = vmatprep.subr.mxu0 0.0
      %1235 = vmatpush1.msra.mxu0 0.0
      %1236 = vmatprep.subr.mxu0 0.0
      %1237 = vmatpush1.msra.mxu0 0.0
      %1238 = vmatprep.subr.mxu0 0.0
      %1239 = vmatpush1.msra.mxu0 0.0
      %1240 = vmatprep.subr.mxu0 0.0
      %1241 = vmatpush1.msra.mxu0 0.0
      %1242 = vmatprep.subr.mxu0 0.0
      %1243 = vmatpush1.msra.mxu0 0.0
      %1244 = vmatprep.subr.mxu0 0.0
      %1245 = vmatpush1.msra.mxu0 0.0
      %1246 = vmatprep.subr.mxu0 0.0
      %1247 = vmatpush1.msra.mxu0 0.0
      %1248 = vmatprep.subr.mxu0 0.0
      %1249 = vmatpush1.msra.mxu0 0.0
      %1250 = vmatprep.subr.mxu0 0.0
      %1251 = vmatpush1.msra.mxu0 0.0
      %1252 = vmatprep.subr.mxu0 0.0
      %1253 = vmatpush1.msra.mxu0 0.0
      %1254 = vmatprep.subr.mxu0 0.0
      %1255 = vmatpush1.msra.mxu0 0.0
      %1256 = vmatprep.subr.mxu0 0.0
      %1257 = vmatpush1.msra.mxu0 0.0
      %1258 = vmatprep.subr.mxu0 0.0
      %1259 = vmatpush1.msra.mxu0 0.0
      %1260 = vmatprep.subr.mxu0 0.0
      %1261 = vmatpush1.msra.mxu0 0.0
      %1262 = vmatprep.subr.mxu0 0.0
      %1263 = vmatpush1.msra.mxu0 0.0
      %1264 = vmatprep.subr.mxu0 0.0
      %1265 = vmatpush1.msra.mxu0 0.0
      %1266 = vmatprep.subr.mxu0 0.0
      %1267 = vmatpush1.msra.mxu0 0.0
      %1268 = vmatprep.subr.mxu0 0.0
      %1269 = vmatpush1.msra.mxu0 0.0
      %1270 = vmatprep.subr.mxu0 0.0
      %1271 = vmatpush1.msra.mxu0 0.0
      %1272 = vmatprep.subr.mxu0 0.0
      %1273 = vmatpush1.msra.mxu0 0.0
      %1274 = vmatprep.mubr.f32.mxu0 0.0
      %1275 = vmatmul.mubr.f32.gmra.mrb[0].mxu0 %v1208
      %v1276 = vpop.f32.mrb[0].mxu0
      %v1277 = vadd.f32 %v1203, %v1276
      %v1278 = vpop.f32.mrb[0].mxu0
      %1279 = vdwg.mxu0
      %1280 = vmatprep.subr.mxu0 0.0
      %1281 = vmatpush1.msra.mxu0 %v1194
      %1282 = vmatprep.subr.mxu0 0.0
      %1283 = vmatpush1.msra.mxu0 %v1195
      %1284 = vmatprep.subr.mxu0 0.0
      %1285 = vmatpush1.msra.mxu0 %v1196
      %1286 = vmatprep.subr.mxu0 0.0
      %1287 = vmatpush1.msra.mxu0 %v1197
      %1288 = vmatprep.subr.mxu0 0.0
      %1289 = vmatpush1.msra.mxu0 0.0
      %1290 = vmatprep.subr.mxu0 0.0
      %1291 = vmatpush1.msra.mxu0 0.0
      %1292 = vmatprep.subr.mxu0 0.0
      %1293 = vmatpush1.msra.mxu0 0.0
      %1294 = vmatprep.subr.mxu0 0.0
      %1295 = vmatpush1.msra.mxu0 0.0
      %1296 = vmatprep.subr.mxu0 0.0
      %1297 = vmatpush1.msra.mxu0 0.0
      %1298 = vmatprep.subr.mxu0 0.0
      %1299 = vmatpush1.msra.mxu0 0.0
      %1300 = vmatprep.subr.mxu0 0.0
      %1301 = vmatpush1.msra.mxu0 0.0
      %1302 = vmatprep.subr.mxu0 0.0
      %1303 = vmatpush1.msra.mxu0 0.0
      %1304 = vmatprep.subr.mxu0 0.0
      %1305 = vmatpush1.msra.mxu0 0.0
      %1306 = vmatprep.subr.mxu0 0.0
      %1307 = vmatpush1.msra.mxu0 0.0
      %1308 = vmatprep.subr.mxu0 0.0
      %1309 = vmatpush1.msra.mxu0 0.0
      %1310 = vmatprep.subr.mxu0 0.0
      %1311 = vmatpush1.msra.mxu0 0.0
      %1312 = vmatprep.subr.mxu0 0.0
      %1313 = vmatpush1.msra.mxu0 0.0
      %1314 = vmatprep.subr.mxu0 0.0
      %1315 = vmatpush1.msra.mxu0 0.0
      %1316 = vmatprep.subr.mxu0 0.0
      %1317 = vmatpush1.msra.mxu0 0.0
      %1318 = vmatprep.subr.mxu0 0.0
      %1319 = vmatpush1.msra.mxu0 0.0
      %1320 = vmatprep.subr.mxu0 0.0
      %1321 = vmatpush1.msra.mxu0 0.0
      %1322 = vmatprep.subr.mxu0 0.0
      %1323 = vmatpush1.msra.mxu0 0.0
      %1324 = vmatprep.subr.mxu0 0.0
      %1325 = vmatpush1.msra.mxu0 0.0
      %1326 = vmatprep.subr.mxu0 0.0
      %1327 = vmatpush1.msra.mxu0 0.0
      %1328 = vmatprep.subr.mxu0 0.0
      %1329 = vmatpush1.msra.mxu0 0.0
      %1330 = vmatprep.subr.mxu0 0.0
      %1331 = vmatpush1.msra.mxu0 0.0
      %1332 = vmatprep.subr.mxu0 0.0
      %1333 = vmatpush1.msra.mxu0 0.0
      %1334 = vmatprep.subr.mxu0 0.0
      %1335 = vmatpush1.msra.mxu0 0.0
      %1336 = vmatprep.subr.mxu0 0.0
      %1337 = vmatpush1.msra.mxu0 0.0
      %1338 = vmatprep.subr.mxu0 0.0
      %1339 = vmatpush1.msra.mxu0 0.0
      %1340 = vmatprep.subr.mxu0 0.0
      %1341 = vmatpush1.msra.mxu0 0.0
      %1342 = vmatprep.subr.mxu0 0.0
      %1343 = vmatpush1.msra.mxu0 0.0
      %1344 = vmatprep.mubr.f32.mxu0 0.0
      %1345 = vmatmul.mubr.f32.gmra.mrb[0].mxu0 %v768
      %v1346 = vpop.f32.mrb[0].mxu0
      %v1347 = vadd.f32 0.0, %v1346
      %v1348 = vpop.f32.mrb[0].mxu0
      %1349 = vdwg.mxu0
      %v1350 = vadd.f32 %v1277, %v1347
      %v1351 = vxor.u32 %v1350, 2147483648
      %v1352 = vmul.f32 %v1351, 1.442695
      %v1353 = vpow.pop %v1352
      %v1354 = vadd.f32 %v1353, 1.0
      %v1355 = vrcp.pop %v1354
      %v1356 = vmul.f32 1.0, %v1355
      %v1357 = vtanh.pop %v1350
      %v1358 = vmul.f32 %v1356, 0.0
      %1360 = vrot.lane.b32.xlu0 %v1357, 64
      %v1361 = vpop.permute.xlu0 %1360
      %v1363 = vmul.f32 %v1356, %v1361
      %1365 = vrot.lane.b32.xlu0 %v1363, 32
      %v1366 = vpop.permute.xlu0 %1365
      %v1368 = vadd.f32 %v1358, %v1366
      %v1369 = vtanh.pop %v1368
      %1371 = vrot.lane.b32.xlu0 %v1369, 64
      %v1372 = vpop.permute.xlu0 %1371
      %v1374 = vmul.f32 %v1356, %v1372
      %1376 = vrot.lane.b32.xlu0 %v1374, 32
      %v1377 = vpop.permute.xlu0 %1376
      %v1378 = vsel %vm524, %v1377, 0
      %1380 = vmatprep.subr.mxu0 0.0
      %1381 = vmatpush1.msra.mxu0 %v1194
      %1382 = vmatprep.subr.mxu0 0.0
      %1383 = vmatpush1.msra.mxu0 %v1195
      %1384 = vmatprep.subr.mxu0 0.0
      %1385 = vmatpush1.msra.mxu0 %v1196
      %1386 = vmatprep.subr.mxu0 0.0
      %1387 = vmatpush1.msra.mxu0 %v1197
      %1388 = vmatprep.subr.mxu0 0.0
      %1389 = vmatpush1.msra.mxu0 0.0
      %1390 = vmatprep.subr.mxu0 0.0
      %1391 = vmatpush1.msra.mxu0 0.0
      %1392 = vmatprep.subr.mxu0 0.0
      %1393 = vmatpush1.msra.mxu0 0.0
      %1394 = vmatprep.subr.mxu0 0.0
      %1395 = vmatpush1.msra.mxu0 0.0
      %1396 = vmatprep.subr.mxu0 0.0
      %1397 = vmatpush1.msra.mxu0 0.0
      %1398 = vmatprep.subr.mxu0 0.0
      %1399 = vmatpush1.msra.mxu0 0.0
      %1400 = vmatprep.subr.mxu0 0.0
      %1401 = vmatpush1.msra.mxu0 0.0
      %1402 = vmatprep.subr.mxu0 0.0
      %1403 = vmatpush1.msra.mxu0 0.0
      %1404 = vmatprep.subr.mxu0 0.0
      %1405 = vmatpush1.msra.mxu0 0.0
      %1406 = vmatprep.subr.mxu0 0.0
      %1407 = vmatpush1.msra.mxu0 0.0
      %1408 = vmatprep.subr.mxu0 0.0
      %1409 = vmatpush1.msra.mxu0 0.0
      %1410 = vmatprep.subr.mxu0 0.0
      %1411 = vmatpush1.msra.mxu0 0.0
      %1412 = vmatprep.subr.mxu0 0.0
      %1413 = vmatpush1.msra.mxu0 0.0
      %1414 = vmatprep.subr.mxu0 0.0
      %1415 = vmatpush1.msra.mxu0 0.0
      %1416 = vmatprep.subr.mxu0 0.0
      %1417 = vmatpush1.msra.mxu0 0.0
      %1418 = vmatprep.subr.mxu0 0.0
      %1419 = vmatpush1.msra.mxu0 0.0
      %1420 = vmatprep.subr.mxu0 0.0
      %1421 = vmatpush1.msra.mxu0 0.0
      %1422 = vmatprep.subr.mxu0 0.0
      %1423 = vmatpush1.msra.mxu0 0.0
      %1424 = vmatprep.subr.mxu0 0.0
      %1425 = vmatpush1.msra.mxu0 0.0
      %1426 = vmatprep.subr.mxu0 0.0
      %1427 = vmatpush1.msra.mxu0 0.0
      %1428 = vmatprep.subr.mxu0 0.0
      %1429 = vmatpush1.msra.mxu0 0.0
      %1430 = vmatprep.subr.mxu0 0.0
      %1431 = vmatpush1.msra.mxu0 0.0
      %1432 = vmatprep.subr.mxu0 0.0
      %1433 = vmatpush1.msra.mxu0 0.0
      %1434 = vmatprep.subr.mxu0 0.0
      %1435 = vmatpush1.msra.mxu0 0.0
      %1436 = vmatprep.subr.mxu0 0.0
      %1437 = vmatpush1.msra.mxu0 0.0
      %1438 = vmatprep.subr.mxu0 0.0
      %1439 = vmatpush1.msra.mxu0 0.0
      %1440 = vmatprep.subr.mxu0 0.0
      %1441 = vmatpush1.msra.mxu0 0.0
      %1442 = vmatprep.subr.mxu0 0.0
      %1443 = vmatpush1.msra.mxu0 0.0
      %1444 = vmatprep.mubr.f32.mxu0 0.0
      %1445 = vmatmul.mubr.f32.gmra.mrb[0].mxu0 %v1378
      %v1446 = vpop.f32.mrb[0].mxu0
      %v1447 = vadd.f32 0.0, %v1446
      %v1448 = vpop.f32.mrb[0].mxu0
      %1449 = vdwg.mxu0
      %v1451 = vrot.slane %v1447, 7
      %v1453 = vadd.f32 %v1277, %v1451
      %v1454 = vxor.u32 %v1453, 2147483648
      %v1455 = vmul.f32 %v1454, 1.442695
      %v1456 = vpow.pop %v1455
      %v1457 = vadd.f32 %v1456, 1.0
      %v1458 = vrcp.pop %v1457
      %v1459 = vmul.f32 1.0, %v1458
      %v1460 = vtanh.pop %v1453
      %v1462 = vrot.slane %v1368, 7
      %v1464 = vmul.f32 %v1459, %v1462
      %1466 = vrot.lane.b32.xlu0 %v1460, 64
      %v1467 = vpop.permute.xlu0 %1466
      %v1469 = vmul.f32 %v1459, %v1467
      %1471 = vrot.lane.b32.xlu0 %v1469, 32
      %v1472 = vpop.permute.xlu0 %1471
      %v1474 = vadd.f32 %v1464, %v1472
      %v1475 = vtanh.pop %v1474
      %1477 = vrot.lane.b32.xlu0 %v1475, 64
      %v1478 = vpop.permute.xlu0 %1477
      %v1480 = vmul.f32 %v1459, %v1478
      %v1482 = vrot.slane %v1480, 1
      %1483 = vrot.lane.b32.xlu0 %v1482, 32
      %v1484 = vpop.permute.xlu0 %1483
      %v1485 = vsel %vm524, %v1484, 0
      %1487 = vmatprep.subr.mxu0 0.0
      %1488 = vmatpush1.msra.mxu0 %v1194
      %1489 = vmatprep.subr.mxu0 0.0
      %1490 = vmatpush1.msra.mxu0 %v1195
      %1491 = vmatprep.subr.mxu0 0.0
      %1492 = vmatpush1.msra.mxu0 %v1196
      %1493 = vmatprep.subr.mxu0 0.0
      %1494 = vmatpush1.msra.mxu0 %v1197
      %1495 = vmatprep.subr.mxu0 0.0
      %1496 = vmatpush1.msra.mxu0 0.0
      %1497 = vmatprep.subr.mxu0 0.0
      %1498 = vmatpush1.msra.mxu0 0.0
      %1499 = vmatprep.subr.mxu0 0.0
      %1500 = vmatpush1.msra.mxu0 0.0
      %1501 = vmatprep.subr.mxu0 0.0
      %1502 = vmatpush1.msra.mxu0 0.0
      %1503 = vmatprep.subr.mxu0 0.0
      %1504 = vmatpush1.msra.mxu0 0.0
      %1505 = vmatprep.subr.mxu0 0.0
      %1506 = vmatpush1.msra.mxu0 0.0
      %1507 = vmatprep.subr.mxu0 0.0
      %1508 = vmatpush1.msra.mxu0 0.0
      %1509 = vmatprep.subr.mxu0 0.0
      %1510 = vmatpush1.msra.mxu0 0.0
      %1511 = vmatprep.subr.mxu0 0.0
      %1512 = vmatpush1.msra.mxu0 0.0
      %1513 = vmatprep.subr.mxu0 0.0
      %1514 = vmatpush1.msra.mxu0 0.0
      %1515 = vmatprep.subr.mxu0 0.0
      %1516 = vmatpush1.msra.mxu0 0.0
      %1517 = vmatprep.subr.mxu0 0.0
      %1518 = vmatpush1.msra.mxu0 0.0
      %1519 = vmatprep.subr.mxu0 0.0
      %1520 = vmatpush1.msra.mxu0 0.0
      %1521 = vmatprep.subr.mxu0 0.0
      %1522 = vmatpush1.msra.mxu0 0.0
      %1523 = vmatprep.subr.mxu0 0.0
      %1524 = vmatpush1.msra.mxu0 0.0
      %1525 = vmatprep.subr.mxu0 0.0
      %1526 = vmatpush1.msra.mxu0 0.0
      %1527 = vmatprep.subr.mxu0 0.0
      %1528 = vmatpush1.msra.mxu0 0.0
      %1529 = vmatprep.subr.mxu0 0.0
      %1530 = vmatpush1.msra.mxu0 0.0
      %1531 = vmatprep.subr.mxu0 0.0
      %1532 = vmatpush1.msra.mxu0 0.0
      %1533 = vmatprep.subr.mxu0 0.0
      %1534 = vmatpush1.msra.mxu0 0.0
      %1535 = vmatprep.subr.mxu0 0.0
      %1536 = vmatpush1.msra.mxu0 0.0
      %1537 = vmatprep.subr.mxu0 0.0
      %1538 = vmatpush1.msra.mxu0 0.0
      %1539 = vmatprep.subr.mxu0 0.0
      %1540 = vmatpush1.msra.mxu0 0.0
      %1541 = vmatprep.subr.mxu0 0.0
      %1542 = vmatpush1.msra.mxu0 0.0
      %1543 = vmatprep.subr.mxu0 0.0
      %1544 = vmatpush1.msra.mxu0 0.0
      %1545 = vmatprep.subr.mxu0 0.0
      %1546 = vmatpush1.msra.mxu0 0.0
      %1547 = vmatprep.subr.mxu0 0.0
      %1548 = vmatpush1.msra.mxu0 0.0
      %1549 = vmatprep.subr.mxu0 0.0
      %1550 = vmatpush1.msra.mxu0 0.0
      %1551 = vmatprep.mubr.f32.mxu0 0.0
      %1552 = vmatmul.mubr.f32.gmra.mrb[0].mxu0 %v1485
      %v1553 = vpop.f32.mrb[0].mxu0
      %v1554 = vadd.f32 0.0, %v1553
      %v1555 = vpop.f32.mrb[0].mxu0
      %1556 = vdwg.mxu0
      %v1558 = vrot.slane %v1554, 6
      %v1560 = vadd.f32 %v1277, %v1558
      %v1561 = vxor.u32 %v1560, 2147483648
      %v1562 = vmul.f32 %v1561, 1.442695
      %v1563 = vpow.pop %v1562
      %v1564 = vadd.f32 %v1563, 1.0
      %v1565 = vrcp.pop %v1564
      %v1566 = vmul.f32 1.0, %v1565
      %v1567 = vtanh.pop %v1560
      %v1569 = vrot.slane %v1474, 7
      %v1571 = vmul.f32 %v1566, %v1569
      %1573 = vrot.lane.b32.xlu0 %v1567, 64
      %v1574 = vpop.permute.xlu0 %1573
      %v1576 = vmul.f32 %v1566, %v1574
      %1578 = vrot.lane.b32.xlu0 %v1576, 32
      %v1579 = vpop.permute.xlu0 %1578
      %v1581 = vadd.f32 %v1571, %v1579
      %v1582 = vtanh.pop %v1581
      %1584 = vrot.lane.b32.xlu0 %v1582, 64
      %v1585 = vpop.permute.xlu0 %1584
      %v1587 = vmul.f32 %v1566, %v1585
      %v1589 = vrot.slane %v1587, 2
      %1590 = vrot.lane.b32.xlu0 %v1589, 32
      %v1591 = vpop.permute.xlu0 %1590
      %v1592 = vsel %vm524, %v1591, 0
      %1594 = vmatprep.subr.mxu0 0.0
      %1595 = vmatpush1.msra.mxu0 %v1194
      %1596 = vmatprep.subr.mxu0 0.0
      %1597 = vmatpush1.msra.mxu0 %v1195
      %1598 = vmatprep.subr.mxu0 0.0
      %1599 = vmatpush1.msra.mxu0 %v1196
      %1600 = vmatprep.subr.mxu0 0.0
      %1601 = vmatpush1.msra.mxu0 %v1197
      %1602 = vmatprep.subr.mxu0 0.0
      %1603 = vmatpush1.msra.mxu0 0.0
      %1604 = vmatprep.subr.mxu0 0.0
      %1605 = vmatpush1.msra.mxu0 0.0
      %1606 = vmatprep.subr.mxu0 0.0
      %1607 = vmatpush1.msra.mxu0 0.0
      %1608 = vmatprep.subr.mxu0 0.0
      %1609 = vmatpush1.msra.mxu0 0.0
      %1610 = vmatprep.subr.mxu0 0.0
      %1611 = vmatpush1.msra.mxu0 0.0
      %1612 = vmatprep.subr.mxu0 0.0
      %1613 = vmatpush1.msra.mxu0 0.0
      %1614 = vmatprep.subr.mxu0 0.0
      %1615 = vmatpush1.msra.mxu0 0.0
      %1616 = vmatprep.subr.mxu0 0.0
      %1617 = vmatpush1.msra.mxu0 0.0
      %1618 = vmatprep.subr.mxu0 0.0
      %1619 = vmatpush1.msra.mxu0 0.0
      %1620 = vmatprep.subr.mxu0 0.0
      %1621 = vmatpush1.msra.mxu0 0.0
      %1622 = vmatprep.subr.mxu0 0.0
      %1623 = vmatpush1.msra.mxu0 0.0
      %1624 = vmatprep.subr.mxu0 0.0
      %1625 = vmatpush1.msra.mxu0 0.0
      %1626 = vmatprep.subr.mxu0 0.0
      %1627 = vmatpush1.msra.mxu0 0.0
      %1628 = vmatprep.subr.mxu0 0.0
      %1629 = vmatpush1.msra.mxu0 0.0
      %1630 = vmatprep.subr.mxu0 0.0
      %1631 = vmatpush1.msra.mxu0 0.0
      %1632 = vmatprep.subr.mxu0 0.0
      %1633 = vmatpush1.msra.mxu0 0.0
      %1634 = vmatprep.subr.mxu0 0.0
      %1635 = vmatpush1.msra.mxu0 0.0
      %1636 = vmatprep.subr.mxu0 0.0
      %1637 = vmatpush1.msra.mxu0 0.0
      %1638 = vmatprep.subr.mxu0 0.0
      %1639 = vmatpush1.msra.mxu0 0.0
      %1640 = vmatprep.subr.mxu0 0.0
      %1641 = vmatpush1.msra.mxu0 0.0
      %1642 = vmatprep.subr.mxu0 0.0
      %1643 = vmatpush1.msra.mxu0 0.0
      %1644 = vmatprep.subr.mxu0 0.0
      %1645 = vmatpush1.msra.mxu0 0.0
      %1646 = vmatprep.subr.mxu0 0.0
      %1647 = vmatpush1.msra.mxu0 0.0
      %1648 = vmatprep.subr.mxu0 0.0
      %1649 = vmatpush1.msra.mxu0 0.0
      %1650 = vmatprep.subr.mxu0 0.0
      %1651 = vmatpush1.msra.mxu0 0.0
      %1652 = vmatprep.subr.mxu0 0.0
      %1653 = vmatpush1.msra.mxu0 0.0
      %1654 = vmatprep.subr.mxu0 0.0
      %1655 = vmatpush1.msra.mxu0 0.0
      %1656 = vmatprep.subr.mxu0 0.0
      %1657 = vmatpush1.msra.mxu0 0.0
      %1658 = vmatprep.mubr.f32.mxu0 0.0
      %1659 = vmatmul.mubr.f32.gmra.mrb[0].mxu0 %v1592
      %v1660 = vpop.f32.mrb[0].mxu0
      %v1661 = vadd.f32 0.0, %v1660
      %v1662 = vpop.f32.mrb[0].mxu0
      %1663 = vdwg.mxu0
      %v1665 = vrot.slane %v1661, 5
      %v1667 = vadd.f32 %v1277, %v1665
      %v1668 = vxor.u32 %v1667, 2147483648
      %v1669 = vmul.f32 %v1668, 1.442695
      %v1670 = vpow.pop %v1669
      %v1671 = vadd.f32 %v1670, 1.0
      %v1672 = vrcp.pop %v1671
      %v1673 = vmul.f32 1.0, %v1672
      %v1674 = vtanh.pop %v1667
      %v1676 = vrot.slane %v1581, 7
      %v1678 = vmul.f32 %v1673, %v1676
      %1680 = vrot.lane.b32.xlu0 %v1674, 64
      %v1681 = vpop.permute.xlu0 %1680
      %v1683 = vmul.f32 %v1673, %v1681
      %1685 = vrot.lane.b32.xlu0 %v1683, 32
      %v1686 = vpop.permute.xlu0 %1685
      %v1688 = vadd.f32 %v1678, %v1686
      %v1689 = vtanh.pop %v1688
      %1691 = vrot.lane.b32.xlu0 %v1689, 64
      %v1692 = vpop.permute.xlu0 %1691
      %v1694 = vmul.f32 %v1673, %v1692
      %1696 = vrot.lane.b32.xlu0 %v1482, 64
      %v1697 = vpop.permute.xlu0 %1696
      %1699 = vrot.lane.b32.xlu0 %v1589, 96
      %v1700 = vpop.permute.xlu0 %1699
      %v1703 = vrot.slane %v1694, 3
      %v1705 = vsel %vm524, %v1377, %v1697
      %vm1706 = vcmask 523264
      %v1707 = vsel %vm1706, %v1705, %v1700
      %vm1708 = vcmask 785408
      %v1709 = vsel %vm1708, %v1707, %v1703
      %1710 = vst [vmem:[%s423] sm:$0x1] %v1709
      %p1711 = scmp.lt.s32.totalorder %s23, 1
      %s1712 = scalar_select %p1711, %s23, 1
      %s1713 = scalar_lea.vmem %s12, %s1712
      // Predicated region
      $region69: #{_forward_jit.1} parent=67 // pred_check
        %p1714 = pneg %p303
      $region70: #{_forward_jit.1} parent=67 // pred_check_branch
        %1716 = sbr.rel (%p1714) target = $region72
      $region71: #{_forward_jit.1} parent=67 // pred_region
        _
      $region72: #{_forward_jit.1} parent=67 // pred_fallthru
        _
    $region68: #{_forward_jit.1} parent=5 // pred_fallthru
      _
    %p1717 = scmp.le.s32.totalorder 2, %s18
    // Predicated region
    $region73: #{_forward_jit.1} parent=5 // pred_check
      %p1718 = pneg %p1717
    $region74: #{_forward_jit.1} parent=5 // pred_check_branch
      %1720 = sbr.rel (%p1718) target = $region76
    $region75: #{_forward_jit.1} parent=5 // pred_region
      %s1721 = ssub.s32 %s18, 2
      // Predicated region
      $region77: #{_forward_jit.1} parent=75 // pred_check
        %p1722 = pneg %p309
      $region78: #{_forward_jit.1} parent=75 // pred_check_branch
        %1724 = sbr.rel (%p1722) target = $region80
      $region79: #{_forward_jit.1} parent=75 // pred_region
        %p1725 = scmp.lt.s32.totalorder %s24, 1
        %s1726 = scalar_select %p1725, %s24, 1
        %s1727 = scalar_lea.vmem %s12, %s1726
      $region80: #{_forward_jit.1} parent=75 // pred_fallthru
        _
    $region76: #{_forward_jit.1} parent=5 // pred_fallthru
      _
  $region6: #{_forward_jit.1} parent=0 // loop_footer
    %s22 = sadd.s32 1, %s18
  $region7: #{_forward_jit.1} parent=0 // loop_footer_branch
    %17 = sbr.rel target = $region3
  $region8: #{_forward_jit.1} parent=0 // loop_exit
    _

</llo_original>
